<compile_context>
chip_gen: v6e
topology: v6e:2x2x1
jax: 0.10.0
libtpu: 0.0.40
codegen_flags: <defaults>
</compile_context>

<pallas_src>
import functools

import jax
import jax.numpy as jnp
from jax.experimental import pallas as pl
from jax.experimental.pallas import tpu as pltpu


# ---------------------------------------------------------------------------
# Kernel 1: fused GAT (all heads + out_att + ELU + log_softmax over nodes).
# ---------------------------------------------------------------------------

def _fused_gat_kernel(x_ref, adj_ref, wcat_ref, aatt_ref, wout_ref, aout_ref,
                      o_ref, hcat_ref, *, alpha, nheads, nhid):
    """Full GAT forward for a single graph (one batch element).

    x_ref    : (1, N, Fin)            node features (compute dtype)
    adj_ref  : (1, N, N)     int8     adjacency (>0 == edge); has self-loops
    wcat_ref : (Fin, nheads*nhid)     all head W's concatenated along out dim
    aatt_ref : (nheads, 2, nhid) f32  per-head a split into (a1, a2)
    wout_ref : (nheads*nhid, Cpad)    out_att W, zero-padded to Cpad lanes
    aout_ref : (2, Cpad)         f32  out_att a split + zero-padded
    o_ref    : (1, N, Cpad)      f32  lane-dense output (log_softmax over nodes)
    hcat_ref : (N, nheads*nhid)  f32  VMEM scratch: concatenated head outputs
    """
    f32 = jnp.float32
    cd = x_ref.dtype                      # matmul compute dtype (bf16 or f32)

    x = x_ref[0]                                        # (N, Fin)
    # adjacency mask kept as an f32 multiplier for the post-exp masking
    adjf = (adj_ref[0].astype(f32) > 0.0).astype(f32)   # (N, N)

    def masked_softmax_cols(e):
        # softmax over dim=1 of (B, N, N) == axis 0 here.  Instead of
        # where(adj>0, e, -9e15) + softmax we multiply the post-exp values by
        # the mask; with self-loops the denominator is > 0 and the result is
        # identical to the PyTorch formulation (softmax is shift-invariant).
        p = jnp.exp(e - jnp.max(e, axis=0, keepdims=True)) * adjf
        denom = jnp.sum(p, axis=0, keepdims=True)
        return p * pl.reciprocal(denom, approx=True)

    def attention(Wh, a1, a2):
        # (Fout, 1) mat-vecs replaced by VPU broadcast-multiply + lane reduce.
        Wh1 = jnp.sum(Wh * a1, axis=-1, keepdims=True)   # (N, 1)
        Wh2 = jnp.sum(Wh * a2, axis=-1, keepdims=True)   # (N, 1)
        e = Wh1 + Wh2.T                                  # (N, N)
        e = jnp.where(e > 0, e, alpha * e)               # LeakyReLU(alpha)
        return masked_softmax_cols(e)

    def elu(v):
        return jnp.where(v > 0, v, jnp.exp(jnp.minimum(v, 0.0)) - 1.0)

    # Single projection matmul for ALL heads: (N, Fin) @ (Fin, nheads*nhid).
    Wh_all = jnp.dot(x, wcat_ref[...], preferred_element_type=f32)    # f32

    A = aatt_ref[...].astype(f32)                        # (nheads, 2, nhid)
    for h in range(nheads):                              # tiny, unrolled
        Wh = Wh_all[:, h * nhid:(h + 1) * nhid]          # (N, nhid)
        ah = A[h]                                        # (2, nhid)
        att = attention(Wh, ah[0:1, :], ah[1:2, :])
        hp = jnp.dot(att.astype(cd), Wh.astype(cd),
                     preferred_element_type=f32)         # (N, nhid)
        hcat_ref[:, h * nhid:(h + 1) * nhid] = elu(hp)   # hidden heads: ELU

    # out_att layer on the concatenated slab (never leaves VMEM).
    hcat = hcat_ref[...]                                 # (N, nheads*nhid) f32
    Wh_o = jnp.dot(hcat.astype(cd), wout_ref[...],
                   preferred_element_type=f32)           # (N, Cpad)
    a_o = aout_ref[...].astype(f32)                      # (2, Cpad)
    att_o = attention(Wh_o, a_o[0:1, :], a_o[1:2, :])
    hp_o = jnp.dot(att_o.astype(cd), Wh_o.astype(cd),
                   preferred_element_type=f32)           # (N, Cpad)

    out = elu(hp_o)                                      # GAT.forward: F.elu(...)
    # log_softmax over dim=1 of (B, N, C) == node axis == axis 0 here.
    z = out - jnp.max(out, axis=0, keepdims=True)
    out = z - jnp.log(jnp.sum(jnp.exp(z), axis=0, keepdims=True))
    o_ref[0] = out.astype(o_ref.dtype)


def gat_forward(x, adj, gat_params, *, alpha, compute_dtype=jnp.bfloat16):
    """Fused GAT forward (eval mode: dropout == identity)."""
    B, N, Fin = x.shape
    Ws = [W for (W, _) in gat_params["attentions"]]
    As = [a for (_, a) in gat_params["attentions"]]
    nheads = len(Ws)
    nhid = Ws[0].shape[1]
    W_out, a_out = gat_params["out_att"]
    nclass = W_out.shape[1]
    cpad = int(pl.cdiv(nclass, 128)) * 128               # lane-dense output
    hw = nheads * nhid

    # Parameter packing / zero-padding (tiny host-side layout plumbing).
    w_cat = jnp.concatenate(Ws, axis=1).astype(compute_dtype)    # (Fin, hw)
    a_att = jnp.stack([a.reshape(2, nhid) for a in As], axis=0)  # (nheads,2,nhid)
    w_out_p = jnp.zeros((hw, cpad), jnp.float32)
    w_out_p = w_out_p.at[:, :nclass].set(W_out).astype(compute_dtype)
    a_out_p = jnp.zeros((2, cpad), jnp.float32)
    a_out_p = a_out_p.at[:, :nclass].set(a_out.reshape(2, nclass))

    x_c = x.astype(compute_dtype)              # halve HBM bytes in bf16 mode
    adj_i8 = (adj > 0).astype(jnp.int8)        # adjacency is only compared > 0

    kernel = functools.partial(_fused_gat_kernel, alpha=alpha,
                               nheads=nheads, nhid=nhid)
    out_pad = pl.pallas_call(
        kernel,
        out_shape=jax.ShapeDtypeStruct((B, N, cpad), jnp.float32),
        grid=(B,),
        in_specs=[
            pl.BlockSpec((1, N, Fin), lambda b: (b, 0, 0)),
            pl.BlockSpec((1, N, N), lambda b: (b, 0, 0)),
            pl.BlockSpec((Fin, hw), lambda b: (0, 0)),
            pl.BlockSpec((nheads, 2, nhid), lambda b: (0, 0, 0)),
            pl.BlockSpec((hw, cpad), lambda b: (0, 0)),
            pl.BlockSpec((2, cpad), lambda b: (0, 0)),
        ],
        out_specs=pl.BlockSpec((1, N, cpad), lambda b: (b, 0, 0)),
        scratch_shapes=[pltpu.VMEM((N, hw), jnp.float32)],
        compiler_params=pltpu.CompilerParams(
            dimension_semantics=("parallel",)),   # batch shards across TCs
    )(x_c, adj_i8, w_cat, a_att, w_out_p, a_out_p)
    return out_pad[..., :nclass]


# ---------------------------------------------------------------------------
# Kernel 2: ST_GAT tail  (LSTM1 -> LSTM2 -> Linear -> row softmax).
# ---------------------------------------------------------------------------

def _st_tail_kernel(xs_ref, wih1_ref, whh1_ref, b1_ref,
                    wih2_ref, whh2_ref, b2_ref,
                    wlin_ref, blin_ref, o_ref):
    """Runs both LSTMs in lockstep over the sequence, then Linear + softmax.

    xs_ref : (seq, B, n_nodes)  GAT output permuted (2, 0, 1)
    o_ref  : (n_nodes, B, n_preds); wrapper transposes to (B, n_nodes, n_preds)
    """
    f32 = jnp.float32
    seq_len, B, _ = xs_ref.shape
    h1_dim = whh1_ref.shape[0]
    h2_dim = whh2_ref.shape[0]
    n_nodes, _, n_preds = o_ref.shape

    W_ih1 = wih1_ref[...]; W_hh1 = whh1_ref[...]; b1 = b1_ref[...]
    W_ih2 = wih2_ref[...]; W_hh2 = whh2_ref[...]; b2 = b2_ref[...]

    def sigmoid(z):
        return 1.0 / (1.0 + jnp.exp(-z))

    def lstm_cell(x_t, h, c, W_ih, W_hh, b, hdim):
        # gates (i, f, g, o) packed along the lane dim -> one matmul each.
        g = (jnp.dot(x_t, W_ih, preferred_element_type=f32)
             + jnp.dot(h, W_hh, preferred_element_type=f32) + b)
        i = sigmoid(g[:, 0:hdim])
        f = sigmoid(g[:, hdim:2 * hdim])
        gg = jnp.tanh(g[:, 2 * hdim:3 * hdim])
        o = sigmoid(g[:, 3 * hdim:4 * hdim])
        c_new = f * c + i * gg
        h_new = o * jnp.tanh(c_new)
        return h_new, c_new

    def step(t, carry):
        h1, c1, h2, c2 = carry
        x_t = xs_ref[t]                                   # (B, n_nodes)
        h1, c1 = lstm_cell(x_t, h1, c1, W_ih1, W_hh1, b1, h1_dim)
        h2, c2 = lstm_cell(h1, h2, c2, W_ih2, W_hh2, b2, h2_dim)
        return (h1, c1, h2, c2)

    init = (jnp.zeros((B, h1_dim), f32), jnp.zeros((B, h1_dim), f32),
            jnp.zeros((B, h2_dim), f32), jnp.zeros((B, h2_dim), f32))
    _, _, h2, _ = jax.lax.fori_loop(0, seq_len, step, init)

    # Linear on the last hidden state; softmax over each length-n_preds row of
    # the (n_nodes, n_preds) reshape, done row-by-row (reshape-free).
    y = jnp.dot(h2, wlin_ref[...], preferred_element_type=f32) + blin_ref[...]
    for n in range(n_nodes):
        row = y[:, n * n_preds:(n + 1) * n_preds]          # (B, n_preds)
        row = row - jnp.max(row, axis=-1, keepdims=True)
        p = jnp.exp(row)
        p = p * pl.reciprocal(jnp.sum(p, axis=-1, keepdims=True), approx=True)
        o_ref[n] = p.astype(o_ref.dtype)


def st_gat_tail(gat_out, tail_params, *, n_nodes):
    (W_ih1, W_hh1, b1), (W_ih2, W_hh2, b2), (W_lin, b_lin) = tail_params
    # ST_GAT: reshape (no-op) + permute(2, 0, 1): (B, N, C) -> (C, B, N)
    xs = jnp.transpose(gat_out, (2, 0, 1)).astype(jnp.float32)
    B = xs.shape[1]
    n_preds = n_nodes
    out = pl.pallas_call(
        _st_tail_kernel,
        out_shape=jax.ShapeDtypeStruct((n_nodes, B, n_preds), jnp.float32),
    )(xs, W_ih1, W_hh1, b1.reshape(1, -1),
      W_ih2, W_hh2, b2.reshape(1, -1),
      W_lin, b_lin.reshape(1, -1))
    return jnp.transpose(out, (1, 0, 2))                   # (B, n_nodes, n_preds)


def st_gat_forward(x, adj, params, *, alpha, compute_dtype=jnp.bfloat16):
    g = gat_forward(x, adj, params["gat"], alpha=alpha,
                    compute_dtype=compute_dtype)
    return st_gat_tail(g, params["tail"], n_nodes=x.shape[1])


# ---------------------------------------------------------------------------
# Parameter init and pure-JAX references.
# ---------------------------------------------------------------------------

def xavier_uniform(key, shape, gain=1.414):
    fan_in, fan_out = shape[0], shape[1]
    bound = gain * (6.0 / (fan_in + fan_out)) ** 0.5
    return jax.random.uniform(key, shape, jnp.float32, -bound, bound)


def make_params(key, nfeat, nhid, nclass, nheads, n_nodes,
                lstm1_hidden=32, lstm2_hidden=64):
    keys = jax.random.split(key, 2 * nheads + 6)
    it = iter(keys)
    attentions = []
    for _ in range(nheads):
        W = xavier_uniform(next(it), (nfeat, nhid))
        a = xavier_uniform(next(it), (2 * nhid, 1))
        attentions.append((W, a))
    W_out = xavier_uniform(next(it), (nhid * nheads, nclass))
    a_out = xavier_uniform(next(it), (2 * nclass, 1))
    gat = {"attentions": attentions, "out_att": (W_out, a_out)}

    def lstm_init(k, in_size, hidden):
        k1, k2, k3 = jax.random.split(k, 3)
        bound = 1.0 / float(hidden) ** 0.5
        # stored as (in, 4H)/(H, 4H) with gate order (i, f, g, o); bias is
        # b_ih + b_hh folded into one vector.
        W_ih = jax.random.uniform(k1, (in_size, 4 * hidden), jnp.float32, -bound, bound)
        W_hh = jax.random.uniform(k2, (hidden, 4 * hidden), jnp.float32, -bound, bound)
        b = jax.random.uniform(k3, (4 * hidden,), jnp.float32, -bound, bound)
        return (W_ih, W_hh, b)

    lstm1 = lstm_init(next(it), n_nodes, lstm1_hidden)
    lstm2 = lstm_init(next(it), lstm1_hidden, lstm2_hidden)
    bound = 1.0 / float(lstm2_hidden) ** 0.5
    W_lin = jax.random.uniform(next(it), (lstm2_hidden, n_nodes * n_nodes),
                               jnp.float32, -bound, bound)
    b_lin = jax.random.uniform(next(it), (n_nodes * n_nodes,),
                               jnp.float32, -bound, bound)
    return {"gat": gat, "tail": (lstm1, lstm2, (W_lin, b_lin))}


def _ref_gat_layer(h, adj, W, a, alpha, concat, compute_dtype):
    cd, f32 = compute_dtype, jnp.float32
    Fout = W.shape[1]
    Wh = jnp.einsum("bnf,fo->bno", h.astype(cd), W.astype(cd),
                    preferred_element_type=f32)
    Wh1 = jnp.einsum("bno,oz->bnz", Wh, a[:Fout].astype(f32))
    Wh2 = jnp.einsum("bno,oz->bnz", Wh, a[Fout:].astype(f32))
    e = Wh1 + jnp.transpose(Wh2, (0, 2, 1))
    e = jnp.where(e > 0, e, alpha * e)
    att = jnp.where(adj > 0, e, jnp.full_like(e, -9e15))
    att = jax.nn.softmax(att, axis=1)
    h_prime = jnp.einsum("bij,bjo->bio", att.astype(cd), Wh.astype(cd),
                         preferred_element_type=f32)
    return jax.nn.elu(h_prime) if concat else h_prime


def _ref_gat(x, adj, gat_params, alpha, compute_dtype=jnp.float32):
    heads = [_ref_gat_layer(x, adj, W, a, alpha, True, compute_dtype)
             for (W, a) in gat_params["attentions"]]
    h = jnp.concatenate(heads, axis=-1)
    W_out, a_out = gat_params["out_att"]
    out = jax.nn.elu(_ref_gat_layer(h, adj, W_out, a_out, alpha, False,
                                    compute_dtype))
    return jax.nn.log_softmax(out, axis=1)


def _ref_st_tail(gat_out, tail_params, n_nodes):
    (W_ih1, W_hh1, b1), (W_ih2, W_hh2, b2), (W_lin, b_lin) = tail_params
    xs = jnp.transpose(gat_out, (2, 0, 1)).astype(jnp.float32)

    def run_lstm(seq, W_ih, W_hh, b):
        B, H = seq.shape[1], W_hh.shape[0]

        def step(carry, x_t):
            h, c = carry
            g = x_t @ W_ih + h @ W_hh + b
            i = jax.nn.sigmoid(g[:, :H])
            f = jax.nn.sigmoid(g[:, H:2 * H])
            gg = jnp.tanh(g[:, 2 * H:3 * H])
            o = jax.nn.sigmoid(g[:, 3 * H:])
            c = f * c + i * gg
            h = o * jnp.tanh(c)
            return (h, c), h

        (h, _), hs = jax.lax.scan(step, (jnp.zeros((B, H), jnp.float32),
                                         jnp.zeros((B, H), jnp.float32)), seq)
        return hs, h

    hs1, _ = run_lstm(xs, W_ih1, W_hh1, b1)
    _, h2 = run_lstm(hs1, W_ih2, W_hh2, b2)
    y = h2 @ W_lin + b_lin
    y = y.reshape(y.shape[0], n_nodes, n_nodes)
    return jax.nn.softmax(y, axis=-1)


def _ref_st_gat(x, adj, params, alpha, compute_dtype=jnp.float32):
    g = _ref_gat(x, adj, params["gat"], alpha, compute_dtype)
    return _ref_st_tail(g, params["tail"], x.shape[1])


if __name__ == "__main__":
    B, n_nodes = 2, 8            # batch of graphs, nodes (agents) per graph
    input_size = 16              # per-node input features
    heads = 4
    nhid = 64                    # fixed inside ST_GAT's GAT
    nclass = 3 * n_nodes         # 24
    alpha = 0.2                  # ST_GAT passes dropout (=0.2) as alpha too

    key = jax.random.PRNGKey(0)
    kx, kadj, kp = jax.random.split(key, 3)

    x = jax.random.normal(kx, (B, n_nodes, input_size), jnp.float32)
    # random binary adjacency with self-loops (keeps the softmax denominator
    # strictly positive, matching the masked-softmax simplification).
    adj = (jax.random.uniform(kadj, (B, n_nodes, n_nodes)) > 0.5).astype(jnp.float32)
    adj = jnp.maximum(adj, jnp.eye(n_nodes, dtype=jnp.float32)[None])

    params = make_params(kp, input_size, nhid, nclass, heads, n_nodes)

    # 1) GAT kernel in f32 compute mode vs the exact-math f32 reference
    #    (tolerance covers the approx-reciprocal softmax denominators).
    gat_f32 = jax.block_until_ready(
        gat_forward(x, adj, params["gat"], alpha=alpha,
                    compute_dtype=jnp.float32))
    ref_f32 = _ref_gat(x, adj, params["gat"], alpha, compute_dtype=jnp.float32)
    assert gat_f32.shape == (B, n_nodes, nclass)
    assert jnp.allclose(gat_f32, ref_f32, atol=1e-2, rtol=1e-2), \
        "GAT kernel (f32) mismatch vs reference"

    # 2) LSTM/Linear/softmax tail kernel vs pure-JAX reference (f32).
    tail_out = jax.block_until_ready(
        st_gat_tail(ref_f32, params["tail"], n_nodes=n_nodes))
    tail_ref = _ref_st_tail(ref_f32, params["tail"], n_nodes)
    assert tail_out.shape == (B, n_nodes, n_nodes)
    assert jnp.allclose(tail_out, tail_ref, atol=1e-2, rtol=1e-2), \
        "ST_GAT tail kernel mismatch vs reference"

    # 3) Full ST_GAT forward on the default perf path (bf16 matmul operands)
    #    vs a matched-precision reference (same bf16 matmul casts).
    out = jax.block_until_ready(
        st_gat_forward(x, adj, params, alpha=alpha,
                       compute_dtype=jnp.bfloat16))
    ref = _ref_st_gat(x, adj, params, alpha, compute_dtype=jnp.bfloat16)
    assert out.shape == (B, n_nodes, n_nodes)
    assert jnp.allclose(out, ref, atol=3e-2, rtol=3e-2), \
        "ST_GAT end-to-end mismatch vs matched-precision reference"

    print("KERNEL_OK")
</pallas_src>

<mosaic_0001>
module attributes {stable_mosaic.version = 11 : i64} {
  func.func @_fused_gat_kernel(%arg0: i32, %arg1: memref<1x8x16xf32, #tpu.memory_space<vmem>>, %arg2: memref<1x8x8xi8, #tpu.memory_space<vmem>>, %arg3: memref<16x256xf32, #tpu.memory_space<vmem>>, %arg4: memref<4x2x64xf32, #tpu.memory_space<vmem>>, %arg5: memref<256x128xf32, #tpu.memory_space<vmem>>, %arg6: memref<2x128xf32, #tpu.memory_space<vmem>>, %arg7: memref<1x8x128xf32, #tpu.memory_space<vmem>>, %arg8: memref<8x256xf32, #tpu.memory_space<vmem>>) attributes {dimension_semantics = [#tpu.dimension_semantics<parallel>], iteration_bounds = array<i64: 2>, scalar_prefetch = 0 : i64, scratch_operands = 1 : i64, tpu.core_type = #tpu.core_type<tc>, window_params = [{transform_indices = @transform_0, window_bounds = array<i64: 1, 8, 16>}, {transform_indices = @transform_1, window_bounds = array<i64: 1, 8, 8>}, {pipeline_mode = #tpu.pipeline_mode<synchronous>, transform_indices = @transform_2, window_bounds = array<i64: 16, 256>}, {pipeline_mode = #tpu.pipeline_mode<synchronous>, transform_indices = @transform_3, window_bounds = array<i64: 4, 2, 64>}, {pipeline_mode = #tpu.pipeline_mode<synchronous>, transform_indices = @transform_4, window_bounds = array<i64: 256, 128>}, {pipeline_mode = #tpu.pipeline_mode<synchronous>, transform_indices = @transform_5, window_bounds = array<i64: 2, 128>}, {transform_indices = @transform_6, window_bounds = array<i64: 1, 8, 128>}]} {
    %c0 = arith.constant 0 : index
    %c0_0 = arith.constant 0 : index
    %c0_1 = arith.constant 0 : index
    %0 = vector.load %arg1[%c0, %c0_0, %c0_1] : memref<1x8x16xf32, #tpu.memory_space<vmem>>, vector<1x8x16xf32>
    %1 = vector.shape_cast %0 : vector<1x8x16xf32> to vector<8x16xf32>
    %c0_2 = arith.constant 0 : index
    %c0_3 = arith.constant 0 : index
    %c0_4 = arith.constant 0 : index
    %2 = vector.load %arg2[%c0_2, %c0_3, %c0_4] : memref<1x8x8xi8, #tpu.memory_space<vmem>>, vector<1x8x8xi8>
    %3 = vector.shape_cast %2 : vector<1x8x8xi8> to vector<8x8xi8>
    %4 = arith.sitofp %3 : vector<8x8xi8> to vector<8x8xf32>
    %cst = arith.constant 0.000000e+00 : f32
    %5 = vector.broadcast %cst : f32 to vector<8x8xf32>
    %6 = arith.cmpf ogt, %4, %5 : vector<8x8xf32>
    %7 = arith.extui %6 : vector<8x8xi1> to vector<8x8xi32>
    %8 = arith.sitofp %7 : vector<8x8xi32> to vector<8x8xf32>
    %c0_5 = arith.constant 0 : index
    %c0_6 = arith.constant 0 : index
    %9 = vector.load %arg3[%c0_5, %c0_6] : memref<16x256xf32, #tpu.memory_space<vmem>>, vector<16x256xf32>
    %cst_7 = arith.constant dense<0.000000e+00> : vector<8x256xf32>
    %10 = tpu.matmul %1, %9, %cst_7 {dimension_numbers = #tpu.dot_dimension_numbers<[1], [0], [0], [1], [0, 0, 1, 1], [], []>} : vector<8x16xf32>, vector<16x256xf32>, vector<8x256xf32> -> vector<8x256xf32>
    %c0_8 = arith.constant 0 : index
    %c0_9 = arith.constant 0 : index
    %c0_10 = arith.constant 0 : index
    %11 = vector.load %arg4[%c0_8, %c0_9, %c0_10] : memref<4x2x64xf32, #tpu.memory_space<vmem>>, vector<4x2x64xf32>
    %12 = vector.extract_strided_slice %10 {offsets = [0, 0], sizes = [8, 64], strides = [1, 1]} : vector<8x256xf32> to vector<8x64xf32>
    %13 = vector.extract_strided_slice %11 {offsets = [0, 0, 0], sizes = [1, 2, 64], strides = [1, 1, 1]} : vector<4x2x64xf32> to vector<1x2x64xf32>
    %14 = vector.shape_cast %13 : vector<1x2x64xf32> to vector<2x64xf32>
    %15 = vector.extract_strided_slice %14 {offsets = [0, 0], sizes = [1, 64], strides = [1, 1]} : vector<2x64xf32> to vector<1x64xf32>
    %16 = vector.extract_strided_slice %14 {offsets = [1, 0], sizes = [1, 64], strides = [1, 1]} : vector<2x64xf32> to vector<1x64xf32>
    %17 = vector.broadcast %15 : vector<1x64xf32> to vector<8x64xf32>
    %18 = arith.mulf %12, %17 : vector<8x64xf32>
    %cst_11 = arith.constant dense<0.000000e+00> : vector<8xf32>
    %19 = vector.multi_reduction <add>, %18, %cst_11 [1] : vector<8x64xf32> to vector<8xf32>
    %20 = vector.shape_cast %19 : vector<8xf32> to vector<8x1xf32>
    %21 = vector.broadcast %16 : vector<1x64xf32> to vector<8x64xf32>
    %22 = arith.mulf %12, %21 : vector<8x64xf32>
    %cst_12 = arith.constant dense<0.000000e+00> : vector<8xf32>
    %23 = vector.multi_reduction <add>, %22, %cst_12 [1] : vector<8x64xf32> to vector<8xf32>
    %24 = vector.shape_cast %23 : vector<8xf32> to vector<8x1xf32>
    %25 = tpu.transpose %24, [1, 0] : vector<8x1xf32> -> vector<1x8xf32>
    %26 = vector.broadcast %20 : vector<8x1xf32> to vector<8x8xf32>
    %27 = vector.broadcast %25 : vector<1x8xf32> to vector<8x8xf32>
    %28 = arith.addf %26, %27 : vector<8x8xf32>
    %cst_13 = arith.constant 0.000000e+00 : f32
    %29 = vector.broadcast %cst_13 : f32 to vector<8x8xf32>
    %30 = arith.cmpf ogt, %28, %29 : vector<8x8xf32>
    %cst_14 = arith.constant 2.000000e-01 : f32
    %31 = vector.broadcast %cst_14 : f32 to vector<8x8xf32>
    %32 = arith.mulf %31, %28 : vector<8x8xf32>
    %33 = arith.select %30, %28, %32 : vector<8x8xi1>, vector<8x8xf32>
    %cst_15 = arith.constant dense<0xFF800000> : vector<8xf32>
    %34 = vector.multi_reduction <maximumf>, %33, %cst_15 [0] : vector<8x8xf32> to vector<8xf32>
    %35 = vector.shape_cast %34 : vector<8xf32> to vector<1x8xf32>
    %36 = vector.broadcast %35 : vector<1x8xf32> to vector<8x8xf32>
    %37 = arith.subf %33, %36 : vector<8x8xf32>
    %38 = math.exp %37 : vector<8x8xf32>
    %39 = arith.mulf %38, %8 : vector<8x8xf32>
    %cst_16 = arith.constant dense<0.000000e+00> : vector<8xf32>
    %40 = vector.multi_reduction <add>, %39, %cst_16 [0] : vector<8x8xf32> to vector<8xf32>
    %41 = vector.shape_cast %40 : vector<8xf32> to vector<1x8xf32>
    %42 = tpu.reciprocal %41 {approx = true} : vector<1x8xf32> -> vector<1x8xf32>
    %43 = vector.broadcast %42 : vector<1x8xf32> to vector<8x8xf32>
    %44 = arith.mulf %39, %43 : vector<8x8xf32>
    %cst_17 = arith.constant dense<0.000000e+00> : vector<8x64xf32>
    %45 = tpu.matmul %44, %12, %cst_17 {dimension_numbers = #tpu.dot_dimension_numbers<[1], [0], [0], [1], [0, 0, 1, 1], [], []>} : vector<8x8xf32>, vector<8x64xf32>, vector<8x64xf32> -> vector<8x64xf32>
    %cst_18 = arith.constant 0.000000e+00 : f32
    %46 = vector.broadcast %cst_18 : f32 to vector<8x64xf32>
    %47 = arith.cmpf ogt, %45, %46 : vector<8x64xf32>
    %cst_19 = arith.constant 0.000000e+00 : f32
    %48 = vector.broadcast %cst_19 : f32 to vector<8x64xf32>
    %49 = arith.minimumf %45, %48 : vector<8x64xf32>
    %50 = math.exp %49 : vector<8x64xf32>
    %cst_20 = arith.constant 1.000000e+00 : f32
    %51 = vector.broadcast %cst_20 : f32 to vector<8x64xf32>
    %52 = arith.subf %50, %51 : vector<8x64xf32>
    %53 = arith.select %47, %45, %52 : vector<8x64xi1>, vector<8x64xf32>
    %c0_21 = arith.constant 0 : index
    %c0_22 = arith.constant 0 : index
    %54 = vector.load %arg8[%c0_21, %c0_22] : memref<8x256xf32, #tpu.memory_space<vmem>>, vector<8x64xf32>
    tpu.vector_store %arg8[%c0_21, %c0_22], %53 {strides = array<i32>} : memref<8x256xf32, #tpu.memory_space<vmem>>, vector<8x64xf32>,
    %55 = vector.extract_strided_slice %10 {offsets = [0, 64], sizes = [8, 64], strides = [1, 1]} : vector<8x256xf32> to vector<8x64xf32>
    %56 = vector.extract_strided_slice %11 {offsets = [1, 0, 0], sizes = [1, 2, 64], strides = [1, 1, 1]} : vector<4x2x64xf32> to vector<1x2x64xf32>
    %57 = vector.shape_cast %56 : vector<1x2x64xf32> to vector<2x64xf32>
    %58 = vector.extract_strided_slice %57 {offsets = [0, 0], sizes = [1, 64], strides = [1, 1]} : vector<2x64xf32> to vector<1x64xf32>
    %59 = vector.extract_strided_slice %57 {offsets = [1, 0], sizes = [1, 64], strides = [1, 1]} : vector<2x64xf32> to vector<1x64xf32>
    %60 = vector.broadcast %58 : vector<1x64xf32> to vector<8x64xf32>
    %61 = arith.mulf %55, %60 : vector<8x64xf32>
    %cst_23 = arith.constant dense<0.000000e+00> : vector<8xf32>
    %62 = vector.multi_reduction <add>, %61, %cst_23 [1] : vector<8x64xf32> to vector<8xf32>
    %63 = vector.shape_cast %62 : vector<8xf32> to vector<8x1xf32>
    %64 = vector.broadcast %59 : vector<1x64xf32> to vector<8x64xf32>
    %65 = arith.mulf %55, %64 : vector<8x64xf32>
    %cst_24 = arith.constant dense<0.000000e+00> : vector<8xf32>
    %66 = vector.multi_reduction <add>, %65, %cst_24 [1] : vector<8x64xf32> to vector<8xf32>
    %67 = vector.shape_cast %66 : vector<8xf32> to vector<8x1xf32>
    %68 = tpu.transpose %67, [1, 0] : vector<8x1xf32> -> vector<1x8xf32>
    %69 = vector.broadcast %63 : vector<8x1xf32> to vector<8x8xf32>
    %70 = vector.broadcast %68 : vector<1x8xf32> to vector<8x8xf32>
    %71 = arith.addf %69, %70 : vector<8x8xf32>
    %cst_25 = arith.constant 0.000000e+00 : f32
    %72 = vector.broadcast %cst_25 : f32 to vector<8x8xf32>
    %73 = arith.cmpf ogt, %71, %72 : vector<8x8xf32>
    %cst_26 = arith.constant 2.000000e-01 : f32
    %74 = vector.broadcast %cst_26 : f32 to vector<8x8xf32>
    %75 = arith.mulf %74, %71 : vector<8x8xf32>
    %76 = arith.select %73, %71, %75 : vector<8x8xi1>, vector<8x8xf32>
    %cst_27 = arith.constant dense<0xFF800000> : vector<8xf32>
    %77 = vector.multi_reduction <maximumf>, %76, %cst_27 [0] : vector<8x8xf32> to vector<8xf32>
    %78 = vector.shape_cast %77 : vector<8xf32> to vector<1x8xf32>
    %79 = vector.broadcast %78 : vector<1x8xf32> to vector<8x8xf32>
    %80 = arith.subf %76, %79 : vector<8x8xf32>
    %81 = math.exp %80 : vector<8x8xf32>
    %82 = arith.mulf %81, %8 : vector<8x8xf32>
    %cst_28 = arith.constant dense<0.000000e+00> : vector<8xf32>
    %83 = vector.multi_reduction <add>, %82, %cst_28 [0] : vector<8x8xf32> to vector<8xf32>
    %84 = vector.shape_cast %83 : vector<8xf32> to vector<1x8xf32>
    %85 = tpu.reciprocal %84 {approx = true} : vector<1x8xf32> -> vector<1x8xf32>
    %86 = vector.broadcast %85 : vector<1x8xf32> to vector<8x8xf32>
    %87 = arith.mulf %82, %86 : vector<8x8xf32>
    %cst_29 = arith.constant dense<0.000000e+00> : vector<8x64xf32>
    %88 = tpu.matmul %87, %55, %cst_29 {dimension_numbers = #tpu.dot_dimension_numbers<[1], [0], [0], [1], [0, 0, 1, 1], [], []>} : vector<8x8xf32>, vector<8x64xf32>, vector<8x64xf32> -> vector<8x64xf32>
    %cst_30 = arith.constant 0.000000e+00 : f32
    %89 = vector.broadcast %cst_30 : f32 to vector<8x64xf32>
    %90 = arith.cmpf ogt, %88, %89 : vector<8x64xf32>
    %cst_31 = arith.constant 0.000000e+00 : f32
    %91 = vector.broadcast %cst_31 : f32 to vector<8x64xf32>
    %92 = arith.minimumf %88, %91 : vector<8x64xf32>
    %93 = math.exp %92 : vector<8x64xf32>
    %cst_32 = arith.constant 1.000000e+00 : f32
    %94 = vector.broadcast %cst_32 : f32 to vector<8x64xf32>
    %95 = arith.subf %93, %94 : vector<8x64xf32>
    %96 = arith.select %90, %88, %95 : vector<8x64xi1>, vector<8x64xf32>
    %c0_33 = arith.constant 0 : index
    %c64 = arith.constant 64 : index
    %97 = vector.load %arg8[%c0_33, %c64] : memref<8x256xf32, #tpu.memory_space<vmem>>, vector<8x64xf32>
    tpu.vector_store %arg8[%c0_33, %c64], %96 {strides = array<i32>} : memref<8x256xf32, #tpu.memory_space<vmem>>, vector<8x64xf32>,
    %98 = vector.extract_strided_slice %10 {offsets = [0, 128], sizes = [8, 64], strides = [1, 1]} : vector<8x256xf32> to vector<8x64xf32>
    %99 = vector.extract_strided_slice %11 {offsets = [2, 0, 0], sizes = [1, 2, 64], strides = [1, 1, 1]} : vector<4x2x64xf32> to vector<1x2x64xf32>
    %100 = vector.shape_cast %99 : vector<1x2x64xf32> to vector<2x64xf32>
    %101 = vector.extract_strided_slice %100 {offsets = [0, 0], sizes = [1, 64], strides = [1, 1]} : vector<2x64xf32> to vector<1x64xf32>
    %102 = vector.extract_strided_slice %100 {offsets = [1, 0], sizes = [1, 64], strides = [1, 1]} : vector<2x64xf32> to vector<1x64xf32>
    %103 = vector.broadcast %101 : vector<1x64xf32> to vector<8x64xf32>
    %104 = arith.mulf %98, %103 : vector<8x64xf32>
    %cst_34 = arith.constant dense<0.000000e+00> : vector<8xf32>
    %105 = vector.multi_reduction <add>, %104, %cst_34 [1] : vector<8x64xf32> to vector<8xf32>
    %106 = vector.shape_cast %105 : vector<8xf32> to vector<8x1xf32>
    %107 = vector.broadcast %102 : vector<1x64xf32> to vector<8x64xf32>
    %108 = arith.mulf %98, %107 : vector<8x64xf32>
    %cst_35 = arith.constant dense<0.000000e+00> : vector<8xf32>
    %109 = vector.multi_reduction <add>, %108, %cst_35 [1] : vector<8x64xf32> to vector<8xf32>
    %110 = vector.shape_cast %109 : vector<8xf32> to vector<8x1xf32>
    %111 = tpu.transpose %110, [1, 0] : vector<8x1xf32> -> vector<1x8xf32>
    %112 = vector.broadcast %106 : vector<8x1xf32> to vector<8x8xf32>
    %113 = vector.broadcast %111 : vector<1x8xf32> to vector<8x8xf32>
    %114 = arith.addf %112, %113 : vector<8x8xf32>
    %cst_36 = arith.constant 0.000000e+00 : f32
    %115 = vector.broadcast %cst_36 : f32 to vector<8x8xf32>
    %116 = arith.cmpf ogt, %114, %115 : vector<8x8xf32>
    %cst_37 = arith.constant 2.000000e-01 : f32
    %117 = vector.broadcast %cst_37 : f32 to vector<8x8xf32>
    %118 = arith.mulf %117, %114 : vector<8x8xf32>
    %119 = arith.select %116, %114, %118 : vector<8x8xi1>, vector<8x8xf32>
    %cst_38 = arith.constant dense<0xFF800000> : vector<8xf32>
    %120 = vector.multi_reduction <maximumf>, %119, %cst_38 [0] : vector<8x8xf32> to vector<8xf32>
    %121 = vector.shape_cast %120 : vector<8xf32> to vector<1x8xf32>
    %122 = vector.broadcast %121 : vector<1x8xf32> to vector<8x8xf32>
    %123 = arith.subf %119, %122 : vector<8x8xf32>
    %124 = math.exp %123 : vector<8x8xf32>
    %125 = arith.mulf %124, %8 : vector<8x8xf32>
    %cst_39 = arith.constant dense<0.000000e+00> : vector<8xf32>
    %126 = vector.multi_reduction <add>, %125, %cst_39 [0] : vector<8x8xf32> to vector<8xf32>
    %127 = vector.shape_cast %126 : vector<8xf32> to vector<1x8xf32>
    %128 = tpu.reciprocal %127 {approx = true} : vector<1x8xf32> -> vector<1x8xf32>
    %129 = vector.broadcast %128 : vector<1x8xf32> to vector<8x8xf32>
    %130 = arith.mulf %125, %129 : vector<8x8xf32>
    %cst_40 = arith.constant dense<0.000000e+00> : vector<8x64xf32>
    %131 = tpu.matmul %130, %98, %cst_40 {dimension_numbers = #tpu.dot_dimension_numbers<[1], [0], [0], [1], [0, 0, 1, 1], [], []>} : vector<8x8xf32>, vector<8x64xf32>, vector<8x64xf32> -> vector<8x64xf32>
    %cst_41 = arith.constant 0.000000e+00 : f32
    %132 = vector.broadcast %cst_41 : f32 to vector<8x64xf32>
    %133 = arith.cmpf ogt, %131, %132 : vector<8x64xf32>
    %cst_42 = arith.constant 0.000000e+00 : f32
    %134 = vector.broadcast %cst_42 : f32 to vector<8x64xf32>
    %135 = arith.minimumf %131, %134 : vector<8x64xf32>
    %136 = math.exp %135 : vector<8x64xf32>
    %cst_43 = arith.constant 1.000000e+00 : f32
    %137 = vector.broadcast %cst_43 : f32 to vector<8x64xf32>
    %138 = arith.subf %136, %137 : vector<8x64xf32>
    %139 = arith.select %133, %131, %138 : vector<8x64xi1>, vector<8x64xf32>
    %c0_44 = arith.constant 0 : index
    %c128 = arith.constant 128 : index
    %140 = vector.load %arg8[%c0_44, %c128] : memref<8x256xf32, #tpu.memory_space<vmem>>, vector<8x64xf32>
    tpu.vector_store %arg8[%c0_44, %c128], %139 {strides = array<i32>} : memref<8x256xf32, #tpu.memory_space<vmem>>, vector<8x64xf32>,
    %141 = vector.extract_strided_slice %10 {offsets = [0, 192], sizes = [8, 64], strides = [1, 1]} : vector<8x256xf32> to vector<8x64xf32>
    %142 = vector.extract_strided_slice %11 {offsets = [3, 0, 0], sizes = [1, 2, 64], strides = [1, 1, 1]} : vector<4x2x64xf32> to vector<1x2x64xf32>
    %143 = vector.shape_cast %142 : vector<1x2x64xf32> to vector<2x64xf32>
    %144 = vector.extract_strided_slice %143 {offsets = [0, 0], sizes = [1, 64], strides = [1, 1]} : vector<2x64xf32> to vector<1x64xf32>
    %145 = vector.extract_strided_slice %143 {offsets = [1, 0], sizes = [1, 64], strides = [1, 1]} : vector<2x64xf32> to vector<1x64xf32>
    %146 = vector.broadcast %144 : vector<1x64xf32> to vector<8x64xf32>
    %147 = arith.mulf %141, %146 : vector<8x64xf32>
    %cst_45 = arith.constant dense<0.000000e+00> : vector<8xf32>
    %148 = vector.multi_reduction <add>, %147, %cst_45 [1] : vector<8x64xf32> to vector<8xf32>
    %149 = vector.shape_cast %148 : vector<8xf32> to vector<8x1xf32>
    %150 = vector.broadcast %145 : vector<1x64xf32> to vector<8x64xf32>
    %151 = arith.mulf %141, %150 : vector<8x64xf32>
    %cst_46 = arith.constant dense<0.000000e+00> : vector<8xf32>
    %152 = vector.multi_reduction <add>, %151, %cst_46 [1] : vector<8x64xf32> to vector<8xf32>
    %153 = vector.shape_cast %152 : vector<8xf32> to vector<8x1xf32>
    %154 = tpu.transpose %153, [1, 0] : vector<8x1xf32> -> vector<1x8xf32>
    %155 = vector.broadcast %149 : vector<8x1xf32> to vector<8x8xf32>
    %156 = vector.broadcast %154 : vector<1x8xf32> to vector<8x8xf32>
    %157 = arith.addf %155, %156 : vector<8x8xf32>
    %cst_47 = arith.constant 0.000000e+00 : f32
    %158 = vector.broadcast %cst_47 : f32 to vector<8x8xf32>
    %159 = arith.cmpf ogt, %157, %158 : vector<8x8xf32>
    %cst_48 = arith.constant 2.000000e-01 : f32
    %160 = vector.broadcast %cst_48 : f32 to vector<8x8xf32>
    %161 = arith.mulf %160, %157 : vector<8x8xf32>
    %162 = arith.select %159, %157, %161 : vector<8x8xi1>, vector<8x8xf32>
    %cst_49 = arith.constant dense<0xFF800000> : vector<8xf32>
    %163 = vector.multi_reduction <maximumf>, %162, %cst_49 [0] : vector<8x8xf32> to vector<8xf32>
    %164 = vector.shape_cast %163 : vector<8xf32> to vector<1x8xf32>
    %165 = vector.broadcast %164 : vector<1x8xf32> to vector<8x8xf32>
    %166 = arith.subf %162, %165 : vector<8x8xf32>
    %167 = math.exp %166 : vector<8x8xf32>
    %168 = arith.mulf %167, %8 : vector<8x8xf32>
    %cst_50 = arith.constant dense<0.000000e+00> : vector<8xf32>
    %169 = vector.multi_reduction <add>, %168, %cst_50 [0] : vector<8x8xf32> to vector<8xf32>
    %170 = vector.shape_cast %169 : vector<8xf32> to vector<1x8xf32>
    %171 = tpu.reciprocal %170 {approx = true} : vector<1x8xf32> -> vector<1x8xf32>
    %172 = vector.broadcast %171 : vector<1x8xf32> to vector<8x8xf32>
    %173 = arith.mulf %168, %172 : vector<8x8xf32>
    %cst_51 = arith.constant dense<0.000000e+00> : vector<8x64xf32>
    %174 = tpu.matmul %173, %141, %cst_51 {dimension_numbers = #tpu.dot_dimension_numbers<[1], [0], [0], [1], [0, 0, 1, 1], [], []>} : vector<8x8xf32>, vector<8x64xf32>, vector<8x64xf32> -> vector<8x64xf32>
    %cst_52 = arith.constant 0.000000e+00 : f32
    %175 = vector.broadcast %cst_52 : f32 to vector<8x64xf32>
    %176 = arith.cmpf ogt, %174, %175 : vector<8x64xf32>
    %cst_53 = arith.constant 0.000000e+00 : f32
    %177 = vector.broadcast %cst_53 : f32 to vector<8x64xf32>
    %178 = arith.minimumf %174, %177 : vector<8x64xf32>
    %179 = math.exp %178 : vector<8x64xf32>
    %cst_54 = arith.constant 1.000000e+00 : f32
    %180 = vector.broadcast %cst_54 : f32 to vector<8x64xf32>
    %181 = arith.subf %179, %180 : vector<8x64xf32>
    %182 = arith.select %176, %174, %181 : vector<8x64xi1>, vector<8x64xf32>
    %c0_55 = arith.constant 0 : index
    %c192 = arith.constant 192 : index
    %183 = vector.load %arg8[%c0_55, %c192] : memref<8x256xf32, #tpu.memory_space<vmem>>, vector<8x64xf32>
    tpu.vector_store %arg8[%c0_55, %c192], %182 {strides = array<i32>} : memref<8x256xf32, #tpu.memory_space<vmem>>, vector<8x64xf32>,
    %c0_56 = arith.constant 0 : index
    %c0_57 = arith.constant 0 : index
    %184 = vector.load %arg8[%c0_56, %c0_57] : memref<8x256xf32, #tpu.memory_space<vmem>>, vector<8x256xf32>
    %c0_58 = arith.constant 0 : index
    %c0_59 = arith.constant 0 : index
    %185 = vector.load %arg5[%c0_58, %c0_59] : memref<256x128xf32, #tpu.memory_space<vmem>>, vector<256x128xf32>
    %cst_60 = arith.constant dense<0.000000e+00> : vector<8x128xf32>
    %186 = tpu.matmul %184, %185, %cst_60 {dimension_numbers = #tpu.dot_dimension_numbers<[1], [0], [0], [1], [0, 0, 1, 1], [], []>} : vector<8x256xf32>, vector<256x128xf32>, vector<8x128xf32> -> vector<8x128xf32>
    %c0_61 = arith.constant 0 : index
    %c0_62 = arith.constant 0 : index
    %187 = vector.load %arg6[%c0_61, %c0_62] : memref<2x128xf32, #tpu.memory_space<vmem>>, vector<2x128xf32>
    %188 = vector.extract_strided_slice %187 {offsets = [0, 0], sizes = [1, 128], strides = [1, 1]} : vector<2x128xf32> to vector<1x128xf32>
    %189 = vector.extract_strided_slice %187 {offsets = [1, 0], sizes = [1, 128], strides = [1, 1]} : vector<2x128xf32> to vector<1x128xf32>
    %190 = vector.broadcast %188 : vector<1x128xf32> to vector<8x128xf32>
    %191 = arith.mulf %186, %190 : vector<8x128xf32>
    %cst_63 = arith.constant dense<0.000000e+00> : vector<8xf32>
    %192 = vector.multi_reduction <add>, %191, %cst_63 [1] : vector<8x128xf32> to vector<8xf32>
    %193 = vector.shape_cast %192 : vector<8xf32> to vector<8x1xf32>
    %194 = vector.broadcast %189 : vector<1x128xf32> to vector<8x128xf32>
    %195 = arith.mulf %186, %194 : vector<8x128xf32>
    %cst_64 = arith.constant dense<0.000000e+00> : vector<8xf32>
    %196 = vector.multi_reduction <add>, %195, %cst_64 [1] : vector<8x128xf32> to vector<8xf32>
    %197 = vector.shape_cast %196 : vector<8xf32> to vector<8x1xf32>
    %198 = tpu.transpose %197, [1, 0] : vector<8x1xf32> -> vector<1x8xf32>
    %199 = vector.broadcast %193 : vector<8x1xf32> to vector<8x8xf32>
    %200 = vector.broadcast %198 : vector<1x8xf32> to vector<8x8xf32>
    %201 = arith.addf %199, %200 : vector<8x8xf32>
    %cst_65 = arith.constant 0.000000e+00 : f32
    %202 = vector.broadcast %cst_65 : f32 to vector<8x8xf32>
    %203 = arith.cmpf ogt, %201, %202 : vector<8x8xf32>
    %cst_66 = arith.constant 2.000000e-01 : f32
    %204 = vector.broadcast %cst_66 : f32 to vector<8x8xf32>
    %205 = arith.mulf %204, %201 : vector<8x8xf32>
    %206 = arith.select %203, %201, %205 : vector<8x8xi1>, vector<8x8xf32>
    %cst_67 = arith.constant dense<0xFF800000> : vector<8xf32>
    %207 = vector.multi_reduction <maximumf>, %206, %cst_67 [0] : vector<8x8xf32> to vector<8xf32>
    %208 = vector.shape_cast %207 : vector<8xf32> to vector<1x8xf32>
    %209 = vector.broadcast %208 : vector<1x8xf32> to vector<8x8xf32>
    %210 = arith.subf %206, %209 : vector<8x8xf32>
    %211 = math.exp %210 : vector<8x8xf32>
    %212 = arith.mulf %211, %8 : vector<8x8xf32>
    %cst_68 = arith.constant dense<0.000000e+00> : vector<8xf32>
    %213 = vector.multi_reduction <add>, %212, %cst_68 [0] : vector<8x8xf32> to vector<8xf32>
    %214 = vector.shape_cast %213 : vector<8xf32> to vector<1x8xf32>
    %215 = tpu.reciprocal %214 {approx = true} : vector<1x8xf32> -> vector<1x8xf32>
    %216 = vector.broadcast %215 : vector<1x8xf32> to vector<8x8xf32>
    %217 = arith.mulf %212, %216 : vector<8x8xf32>
    %cst_69 = arith.constant dense<0.000000e+00> : vector<8x128xf32>
    %218 = tpu.matmul %217, %186, %cst_69 {dimension_numbers = #tpu.dot_dimension_numbers<[1], [0], [0], [1], [0, 0, 1, 1], [], []>} : vector<8x8xf32>, vector<8x128xf32>, vector<8x128xf32> -> vector<8x128xf32>
    %cst_70 = arith.constant 0.000000e+00 : f32
    %219 = vector.broadcast %cst_70 : f32 to vector<8x128xf32>
    %220 = arith.cmpf ogt, %218, %219 : vector<8x128xf32>
    %cst_71 = arith.constant 0.000000e+00 : f32
    %221 = vector.broadcast %cst_71 : f32 to vector<8x128xf32>
    %222 = arith.minimumf %218, %221 : vector<8x128xf32>
    %223 = math.exp %222 : vector<8x128xf32>
    %cst_72 = arith.constant 1.000000e+00 : f32
    %224 = vector.broadcast %cst_72 : f32 to vector<8x128xf32>
    %225 = arith.subf %223, %224 : vector<8x128xf32>
    %226 = arith.select %220, %218, %225 : vector<8x128xi1>, vector<8x128xf32>
    %cst_73 = arith.constant dense<0xFF800000> : vector<128xf32>
    %227 = vector.multi_reduction <maximumf>, %226, %cst_73 [0] : vector<8x128xf32> to vector<128xf32>
    %228 = vector.shape_cast %227 : vector<128xf32> to vector<1x128xf32>
    %229 = vector.broadcast %228 : vector<1x128xf32> to vector<8x128xf32>
    %230 = arith.subf %226, %229 : vector<8x128xf32>
    %231 = math.exp %230 : vector<8x128xf32>
    %cst_74 = arith.constant dense<0.000000e+00> : vector<128xf32>
    %232 = vector.multi_reduction <add>, %231, %cst_74 [0] : vector<8x128xf32> to vector<128xf32>
    %233 = vector.shape_cast %232 : vector<128xf32> to vector<1x128xf32>
    %234 = math.log %233 : vector<1x128xf32>
    %235 = vector.broadcast %234 : vector<1x128xf32> to vector<8x128xf32>
    %236 = arith.subf %230, %235 : vector<8x128xf32>
    %c0_75 = arith.constant 0 : index
    %c0_76 = arith.constant 0 : index
    %c0_77 = arith.constant 0 : index
    %237 = vector.load %arg7[%c0_75, %c0_76, %c0_77] : memref<1x8x128xf32, #tpu.memory_space<vmem>>, vector<1x8x128xf32>
    %238 = vector.shape_cast %237 : vector<1x8x128xf32> to vector<8x128xf32>
    %239 = vector.shape_cast %236 : vector<8x128xf32> to vector<1x8x128xf32>
    tpu.vector_store %arg7[%c0_75, %c0_76, %c0_77], %239 {strides = array<i32>} : memref<1x8x128xf32, #tpu.memory_space<vmem>>, vector<1x8x128xf32>,
    return
  }
  func.func @transform_0(%arg0: i32) -> (i32, i32, i32) {
    %c0_i32 = arith.constant 0 : i32
    %c0_i32_0 = arith.constant 0 : i32
    %c0_i32_1 = arith.constant 0 : i32
    return %arg0, %c0_i32, %c0_i32_0 : i32, i32, i32
  }
  func.func @transform_1(%arg0: i32) -> (i32, i32, i32) {
    %c0_i32 = arith.constant 0 : i32
    %c0_i32_0 = arith.constant 0 : i32
    %c0_i32_1 = arith.constant 0 : i32
    return %arg0, %c0_i32, %c0_i32_0 : i32, i32, i32
  }
  func.func @transform_2(%arg0: i32) -> (i32, i32) {
    %c0_i32 = arith.constant 0 : i32
    %c0_i32_0 = arith.constant 0 : i32
    %c0_i32_1 = arith.constant 0 : i32
    return %c0_i32, %c0_i32_0 : i32, i32
  }
  func.func @transform_3(%arg0: i32) -> (i32, i32, i32) {
    %c0_i32 = arith.constant 0 : i32
    %c0_i32_0 = arith.constant 0 : i32
    %c0_i32_1 = arith.constant 0 : i32
    %c0_i32_2 = arith.constant 0 : i32
    return %c0_i32, %c0_i32_0, %c0_i32_1 : i32, i32, i32
  }
  func.func @transform_4(%arg0: i32) -> (i32, i32) {
    %c0_i32 = arith.constant 0 : i32
    %c0_i32_0 = arith.constant 0 : i32
    %c0_i32_1 = arith.constant 0 : i32
    return %c0_i32, %c0_i32_0 : i32, i32
  }
  func.func @transform_5(%arg0: i32) -> (i32, i32) {
    %c0_i32 = arith.constant 0 : i32
    %c0_i32_0 = arith.constant 0 : i32
    %c0_i32_1 = arith.constant 0 : i32
    return %c0_i32, %c0_i32_0 : i32, i32
  }
  func.func @transform_6(%arg0: i32) -> (i32, i32, i32) {
    %c0_i32 = arith.constant 0 : i32
    %c0_i32_0 = arith.constant 0 : i32
    %c0_i32_1 = arith.constant 0 : i32
    return %arg0, %c0_i32, %c0_i32_0 : i32, i32, i32
  }
}

</mosaic_0001>

<llo_original>
// kernel: tpu_custom_call.1
$region0: #{tpu_custom_call.1}
  #allocation0 [shape = 'u32[]', space=smem, size = 0x4, offset = 0x4, fixed_abs, tag = 'smem constant byte address 0x4 - core index']
  #allocation1 [shape = 'u32[144,128]{1,0:T(1,128)}', space=vmem, size = 0x12000, scoped, tag = 'internal scratch']
  #allocation2 [shape = 'f32[8,256]{1,0:T(8,128)}', space=vmem, size = 0x2000, scoped, tag = 'scratch operand']
  %s0 = inlined_call_operand.hbm [shape: f32[2,8,16], index: 0, kind: input, shape index: {}]
  %s1 = inlined_call_operand.hbm [shape: s8[2,8,8], index: 1, kind: input, shape index: {}]
  %s2 = inlined_call_operand.hbm [shape: f32[16,256], index: 2, kind: input, shape index: {}]
  %s3 = inlined_call_operand.hbm [shape: f32[4,2,64], index: 3, kind: input, shape index: {}]
  %s4 = inlined_call_operand.hbm [shape: f32[256,128], index: 4, kind: input, shape index: {}]
  %s5 = inlined_call_operand.vmem [shape: f32[2,128], index: 5, kind: input, shape index: {}]
  %s6 = inlined_call_operand.hbm [shape: f32[2,8,128], index: 6, kind: output, shape index: {}]
  %s7 = sld [smem:[#allocation0]]
  $region77: #{tpu_custom_call.1} parent=0
    _
  %s9 = ssub.s32 1, %s7
  %s10 = scalar_select 0, %s9, %s7
  $region1: #{tpu_custom_call.1} parent=0
    #allocation3 [shape = 'u8[8192]{0}', space=vmem, size = 0x2000, scoped, tag = 'input window, operand 0']
    #allocation4 [shape = 's32[2]{0}', space=sflag, size = 0x8, scoped, tag = 'scoped memory for tpu_custom_call.1']
    #allocation5 [shape = 's32[2]{0}', space=sflag, size = 0x8, scoped, tag = 'scoped memory for tpu_custom_call.1']
    #allocation6 [shape = 'u8[2048]{0}', space=vmem, size = 0x800, scoped, tag = 'input window, operand 1']
    #allocation7 [shape = 's32[2]{0}', space=sflag, size = 0x8, scoped, tag = 'scoped memory for tpu_custom_call.1']
    #allocation8 [shape = 'u8[16384]{0}', space=vmem, size = 0x4000, scoped, tag = 'input window, operand 2, single buffered']
    #allocation9 [shape = 'u8[4096]{0}', space=vmem, size = 0x1000, scoped, tag = 'input window, operand 3, single buffered']
    #allocation10 [shape = 's32[1]{0}', space=sflag, size = 0x4, scoped, tag = 'scoped memory for tpu_custom_call.1']
    #allocation11 [shape = 'u8[131072]{0}', space=vmem, size = 0x20000, scoped, tag = 'input window, operand 4, single buffered']
    #allocation12 [shape = 'u8[8192]{0}', space=vmem, size = 0x2000, scoped, tag = 'output window, operand 0']
    %11 = vsyncpa [#allocation4], 0
    %s12 = scalar_lea.sflag [#allocation4], 1
    %13 = vsyncpa %s12, 0
    %14 = vsyncpa [#allocation7], 0
    %s15 = scalar_lea.sflag [#allocation7], 1
    %16 = vsyncpa %s15, 0
    %17 = vsyncpa [#allocation10], 0
    %18 = vsyncpa [#allocation5], 0
    %s19 = scalar_lea.sflag [#allocation5], 1
    %20 = vsyncpa %s19, 0
    loop: start=0, step=1, limit=4
    $region2: #{tpu_custom_call.1} parent=1 // loop_pre_header
      _
    $region3: #{tpu_custom_call.1} parent=1 // loop_header
      %s22 = sphi 0, %s26
      %p23 = scmp.ge.s32.totalorder %s22, 4
      %s32 = sphi 0, %s34
      %s35 = sphi 0, %s32
      %s36 = sphi 0, %s35
      %s52 = sphi 0, %s36
      %s58 = sphi 0, %s60
      %s61 = sphi 0, %s58
      %s62 = sphi 0, %s61
      %s78 = sphi 0, %s62
      %s82 = sphi 0, %s82
      %s84 = sphi 0, %s82
      %s85 = sphi 0, %s84
      %s99 = sphi 0, %s85
      %s103 = sphi 0, %s103
      %s105 = sphi 0, %s103
      %s106 = sphi 0, %s105
      %s120 = sphi 0, %s106
      %s124 = sphi 0, %s124
      %s126 = sphi 0, %s124
      %s127 = sphi 0, %s126
      %s141 = sphi 0, %s127
      %s145 = sphi 0, %s145
      %s147 = sphi 0, %s145
      %s148 = sphi 0, %s147
      %s162 = sphi 0, %s148
      %s168 = sphi 0, %s170
      %s171 = sphi 0, %s168
      %s172 = sphi 0, %s171
      %s188 = sphi 0, %s172
    $region4: #{tpu_custom_call.1} parent=1 // loop_header_branch
      %25 = sbr.rel (%p23) target = $region8
    $region5: #{tpu_custom_call.1} parent=1 // loop_body
      %s27 = ssub.s32 %s22, 1
      %s28 = ssub.s32 %s22, 2
      %s29 = sadd.s32 %s22, 1
      %s30 = ssub.s32 %s22, %s29
      %p31 = scmp.eq.s32.totalorder %s30, 0
      %s33 = sadd.s32 %s32, 1
      %s34 = scalar_select %p31, %s32, %s33
      %p37 = pneg %p31
      %p38 = scmp.eq.s32.totalorder %s22, 1
      %p39 = por %p37, %p38
      %p40 = scmp.ne.s32.totalorder %s32, %s35
      %p41 = scmp.eq.s32.totalorder %s22, 0
      %p42 = por %p40, %p41
      %p43 = scmp.ne.s32.totalorder %s32, %s35
      %p44 = scmp.eq.s32.totalorder %s27, 1
      %p45 = por %p43, %p44
      %p46 = scmp.ne.s32.totalorder %s35, %s36
      %p47 = scmp.eq.s32.totalorder %s27, 0
      %p48 = por %p46, %p47
      %p49 = scmp.ne.s32.totalorder %s35, %s36
      %p50 = scmp.eq.s32.totalorder %s28, 1
      %p51 = por %p49, %p50
      %p53 = scmp.ne.s32.totalorder %s36, %s52
      %p54 = scmp.eq.s32.totalorder %s28, 0
      %p55 = por %p53, %p54
      %s56 = ssub.s32 %s22, %s29
      %p57 = scmp.eq.s32.totalorder %s56, 0
      %s59 = sadd.s32 %s58, 1
      %s60 = scalar_select %p57, %s58, %s59
      %p63 = pneg %p57
      %p64 = scmp.eq.s32.totalorder %s22, 1
      %p65 = por %p63, %p64
      %p66 = scmp.ne.s32.totalorder %s58, %s61
      %p67 = scmp.eq.s32.totalorder %s22, 0
      %p68 = por %p66, %p67
      %p69 = scmp.ne.s32.totalorder %s58, %s61
      %p70 = scmp.eq.s32.totalorder %s27, 1
      %p71 = por %p69, %p70
      %p72 = scmp.ne.s32.totalorder %s61, %s62
      %p73 = scmp.eq.s32.totalorder %s27, 0
      %p74 = por %p72, %p73
      %p75 = scmp.ne.s32.totalorder %s61, %s62
      %p76 = scmp.eq.s32.totalorder %s28, 1
      %p77 = por %p75, %p76
      %p79 = scmp.ne.s32.totalorder %s62, %s78
      %p80 = scmp.eq.s32.totalorder %s28, 0
      %p81 = por %p79, %p80
      %s83 = sadd.s32 %s82, 1
      %p86 = scmp.eq.s32.totalorder %s22, 1
      %p87 = scmp.ne.s32.totalorder %s82, %s84
      %p88 = scmp.eq.s32.totalorder %s22, 0
      %p89 = por %p87, %p88
      %p90 = scmp.ne.s32.totalorder %s82, %s84
      %p91 = scmp.eq.s32.totalorder %s27, 1
      %p92 = por %p90, %p91
      %p93 = scmp.ne.s32.totalorder %s84, %s85
      %p94 = scmp.eq.s32.totalorder %s27, 0
      %p95 = por %p93, %p94
      %p96 = scmp.ne.s32.totalorder %s84, %s85
      %p97 = scmp.eq.s32.totalorder %s28, 1
      %p98 = por %p96, %p97
      %p100 = scmp.ne.s32.totalorder %s85, %s99
      %p101 = scmp.eq.s32.totalorder %s28, 0
      %p102 = por %p100, %p101
      %s104 = sadd.s32 %s103, 1
      %p107 = scmp.eq.s32.totalorder %s22, 1
      %p108 = scmp.ne.s32.totalorder %s103, %s105
      %p109 = scmp.eq.s32.totalorder %s22, 0
      %p110 = por %p108, %p109
      %p111 = scmp.ne.s32.totalorder %s103, %s105
      %p112 = scmp.eq.s32.totalorder %s27, 1
      %p113 = por %p111, %p112
      %p114 = scmp.ne.s32.totalorder %s105, %s106
      %p115 = scmp.eq.s32.totalorder %s27, 0
      %p116 = por %p114, %p115
      %p117 = scmp.ne.s32.totalorder %s105, %s106
      %p118 = scmp.eq.s32.totalorder %s28, 1
      %p119 = por %p117, %p118
      %p121 = scmp.ne.s32.totalorder %s106, %s120
      %p122 = scmp.eq.s32.totalorder %s28, 0
      %p123 = por %p121, %p122
      %s125 = sadd.s32 %s124, 1
      %p128 = scmp.eq.s32.totalorder %s22, 1
      %p129 = scmp.ne.s32.totalorder %s124, %s126
      %p130 = scmp.eq.s32.totalorder %s22, 0
      %p131 = por %p129, %p130
      %p132 = scmp.ne.s32.totalorder %s124, %s126
      %p133 = scmp.eq.s32.totalorder %s27, 1
      %p134 = por %p132, %p133
      %p135 = scmp.ne.s32.totalorder %s126, %s127
      %p136 = scmp.eq.s32.totalorder %s27, 0
      %p137 = por %p135, %p136
      %p138 = scmp.ne.s32.totalorder %s126, %s127
      %p139 = scmp.eq.s32.totalorder %s28, 1
      %p140 = por %p138, %p139
      %p142 = scmp.ne.s32.totalorder %s127, %s141
      %p143 = scmp.eq.s32.totalorder %s28, 0
      %p144 = por %p142, %p143
      %s146 = sadd.s32 %s145, 1
      %p149 = scmp.eq.s32.totalorder %s22, 1
      %p150 = scmp.ne.s32.totalorder %s145, %s147
      %p151 = scmp.eq.s32.totalorder %s22, 0
      %p152 = por %p150, %p151
      %p153 = scmp.ne.s32.totalorder %s145, %s147
      %p154 = scmp.eq.s32.totalorder %s27, 1
      %p155 = por %p153, %p154
      %p156 = scmp.ne.s32.totalorder %s147, %s148
      %p157 = scmp.eq.s32.totalorder %s27, 0
      %p158 = por %p156, %p157
      %p159 = scmp.ne.s32.totalorder %s147, %s148
      %p160 = scmp.eq.s32.totalorder %s28, 1
      %p161 = por %p159, %p160
      %p163 = scmp.ne.s32.totalorder %s148, %s162
      %p164 = scmp.eq.s32.totalorder %s28, 0
      %p165 = por %p163, %p164
      %s166 = ssub.s32 %s22, %s29
      %p167 = scmp.eq.s32.totalorder %s166, 0
      %s169 = sadd.s32 %s168, 1
      %s170 = scalar_select %p167, %s168, %s169
      %p173 = pneg %p167
      %p174 = scmp.eq.s32.totalorder %s22, 1
      %p175 = por %p173, %p174
      %p176 = scmp.ne.s32.totalorder %s168, %s171
      %p177 = scmp.eq.s32.totalorder %s22, 0
      %p178 = por %p176, %p177
      %p179 = scmp.ne.s32.totalorder %s168, %s171
      %p180 = scmp.eq.s32.totalorder %s27, 1
      %p181 = por %p179, %p180
      %p182 = scmp.ne.s32.totalorder %s171, %s172
      %p183 = scmp.eq.s32.totalorder %s27, 0
      %p184 = por %p182, %p183
      %p185 = scmp.ne.s32.totalorder %s171, %s172
      %p186 = scmp.eq.s32.totalorder %s28, 1
      %p187 = por %p185, %p186
      %p189 = scmp.ne.s32.totalorder %s172, %s188
      %p190 = scmp.eq.s32.totalorder %s28, 0
      %p191 = por %p189, %p190
      %p192 = scmp.le.s32.totalorder 1, %s22
      %p193 = scmp.lt.s32.totalorder %s22, 3
      %p194 = pnand %p192, %p193
      %p195 = pneg %p194
      // Predicated region
      $region9: #{tpu_custom_call.1} parent=5 // pred_check
        _
      $region10: #{tpu_custom_call.1} parent=5 // pred_check_branch
        %197 = sbr.rel (%p194) target = $region12
      $region11: #{tpu_custom_call.1} parent=5 // pred_region
        %s198 = ssub.s32 %s22, 1
        // Predicated region
        $region13: #{tpu_custom_call.1} parent=11 // pred_check
          %p199 = pneg %p95
        $region14: #{tpu_custom_call.1} parent=11 // pred_check_branch
          %201 = sbr.rel (%p199) target = $region16
        $region15: #{tpu_custom_call.1} parent=11 // pred_region
          %s203 = ssub.s32 512, 512
          %204 = vsyncadd [#allocation7], %s203
          %s205 = sshll.u32 [#allocation8], 4
          %s206 = int_to_ptr.vmem [resolvable:$true] %s205
          %211 = dma.hbm_to_vmem [thread:$0]  %s2, 512, %s206, [#allocation7], 256, 256, 16
        $region16: #{tpu_custom_call.1} parent=11 // pred_fallthru
          _
        // Predicated region
        $region17: #{tpu_custom_call.1} parent=11 // pred_check
          %p212 = pneg %p116
        $region18: #{tpu_custom_call.1} parent=11 // pred_check_branch
          %214 = sbr.rel (%p212) target = $region20
        $region19: #{tpu_custom_call.1} parent=11 // pred_region
          %s216 = ssub.s32 128, 128
          %217 = vsyncadd [#allocation10], %s216
          %s218 = sshll.u32 [#allocation9], 4
          %s219 = int_to_ptr.vmem [resolvable:$true] %s218
          %224 = dma.hbm_to_vmem [thread:$0]  %s3, 128, %s219, [#allocation10], 32, 32, 2
        $region20: #{tpu_custom_call.1} parent=11 // pred_fallthru
          _
        // Predicated region
        $region21: #{tpu_custom_call.1} parent=11 // pred_check
          %p225 = pneg %p137
        $region22: #{tpu_custom_call.1} parent=11 // pred_check_branch
          %227 = sbr.rel (%p225) target = $region24
        $region23: #{tpu_custom_call.1} parent=11 // pred_region
          %s229 = ssub.s32 4096, 4096
          %230 = vsyncadd [#allocation10], %s229
          %s231 = sshll.u32 [#allocation11], 4
          %s232 = int_to_ptr.vmem [resolvable:$true] %s231
          %237 = dma.hbm_to_vmem [thread:$0]  %s4, 4096, %s232, [#allocation10], 128, 128, 8
        $region24: #{tpu_custom_call.1} parent=11 // pred_fallthru
          _
        // Predicated region
        $region25: #{tpu_custom_call.1} parent=11 // pred_check
          %p238 = pneg %p158
        $region26: #{tpu_custom_call.1} parent=11 // pred_check_branch
          %240 = sbr.rel (%p238) target = $region28
        $region27: #{tpu_custom_call.1} parent=11 // pred_region
          _
        $region28: #{tpu_custom_call.1} parent=11 // pred_fallthru
          _
      $region12: #{tpu_custom_call.1} parent=5 // pred_fallthru
        _
      %p241 = scmp.lt.s32.totalorder %s22, 2
      // Predicated region
      $region29: #{tpu_custom_call.1} parent=5 // pred_check
        %p242 = pneg %p241
      $region30: #{tpu_custom_call.1} parent=5 // pred_check_branch
        %244 = sbr.rel (%p242) target = $region32
      $region31: #{tpu_custom_call.1} parent=5 // pred_region
        // Predicated region
        $region33: #{tpu_custom_call.1} parent=31 // pred_check
          %p245 = pneg %p42
        $region34: #{tpu_custom_call.1} parent=31 // pred_check_branch
          %247 = sbr.rel (%p245) target = $region36
        $region35: #{tpu_custom_call.1} parent=31 // pred_region
          %s248 = sand.u32 %s32, 1
          %s249 = scalar_lea.sflag [#allocation4], %s248
          %s250 = sand.u32 %s32, 1
          %s251 = smul.addr %s250, 8
          %s252 = scalar_lea.vmem [#allocation3], %s251
          %s254 = ssub.s32 128, 128
          %255 = vsyncadd %s249, %s254
          %s256 = smul.addr %s22, 128
          %s257 = scalar_lea.hbm %s0, %s256
          %s259 = sshll.u32 %s252, 4
          %s260 = int_to_ptr.vmem [resolvable:$true] %s259
          %262 = dma.hbm_to_vmem [thread:$0]  %s257, 128, %s260, %s249
        $region36: #{tpu_custom_call.1} parent=31 // pred_fallthru
          _
        // Predicated region
        $region37: #{tpu_custom_call.1} parent=31 // pred_check
          %p263 = pneg %p68
        $region38: #{tpu_custom_call.1} parent=31 // pred_check_branch
          %265 = sbr.rel (%p263) target = $region40
        $region39: #{tpu_custom_call.1} parent=31 // pred_region
          %s266 = sand.u32 %s22, 1
          %s267 = scalar_lea.sflag [#allocation7], %s266
          %s268 = sand.u32 %s58, 1
          %s269 = smul.addr %s268, 2
          %s270 = scalar_lea.vmem [#allocation6], %s269
          %s272 = ssub.s32 32, 32
          %273 = vsyncadd %s267, %s272
          %s274 = smul.addr %s22, 32
          %s275 = scalar_lea.hbm %s1, %s274
          %s277 = sshll.u32 %s270, 4
          %s278 = int_to_ptr.vmem [resolvable:$true] %s277
          %280 = dma.hbm_to_vmem [thread:$0]  %s275, 32, %s278, %s267
        $region40: #{tpu_custom_call.1} parent=31 // pred_fallthru
          _
      $region32: #{tpu_custom_call.1} parent=5 // pred_fallthru
        _
      %p281 = scmp.le.s32.totalorder 1, %s22
      %p282 = scmp.lt.s32.totalorder %s22, 3
      %p283 = pnand %p281, %p282
      %p284 = pneg %p283
      // Predicated region
      $region41: #{tpu_custom_call.1} parent=5 // pred_check
        _
      $region42: #{tpu_custom_call.1} parent=5 // pred_check_branch
        %286 = sbr.rel (%p283) target = $region44
      $region43: #{tpu_custom_call.1} parent=5 // pred_region
        %s287 = ssub.s32 %s22, 1
        %s288 = sand.u32 %s35, 1
        %s289 = scalar_lea.sflag [#allocation4], %s288
        %s290 = sand.u32 %s35, 1
        %s291 = smul.addr %s290, 8
        %s292 = scalar_lea.vmem [#allocation3], %s291
        // Predicated region
        $region45: #{tpu_custom_call.1} parent=43 // pred_check
          %p293 = pneg %p48
        $region46: #{tpu_custom_call.1} parent=43 // pred_check_branch
          %295 = sbr.rel (%p293) target = $region48
        $region47: #{tpu_custom_call.1} parent=43 // pred_region
          %296 = dma.done %s289, 128
        $region48: #{tpu_custom_call.1} parent=43 // pred_fallthru
          _
        %s297 = sand.u32 %s27, 1
        %s298 = scalar_lea.sflag [#allocation7], %s297
        %s299 = sand.u32 %s61, 1
        %s300 = smul.addr %s299, 2
        %s301 = scalar_lea.vmem [#allocation6], %s300
        // Predicated region
        $region49: #{tpu_custom_call.1} parent=43 // pred_check
          %p302 = pneg %p74
        $region50: #{tpu_custom_call.1} parent=43 // pred_check_branch
          %304 = sbr.rel (%p302) target = $region52
        $region51: #{tpu_custom_call.1} parent=43 // pred_region
          %305 = dma.done %s298, 32
        $region52: #{tpu_custom_call.1} parent=43 // pred_fallthru
          _
        // Predicated region
        $region53: #{tpu_custom_call.1} parent=43 // pred_check
          %p306 = pneg %p95
        $region54: #{tpu_custom_call.1} parent=43 // pred_check_branch
          %308 = sbr.rel (%p306) target = $region56
        $region55: #{tpu_custom_call.1} parent=43 // pred_region
          %309 = dma.done [#allocation7], 512
        $region56: #{tpu_custom_call.1} parent=43 // pred_fallthru
          _
        // Predicated region
        $region57: #{tpu_custom_call.1} parent=43 // pred_check
          %p310 = pneg %p116
        $region58: #{tpu_custom_call.1} parent=43 // pred_check_branch
          %312 = sbr.rel (%p310) target = $region60
        $region59: #{tpu_custom_call.1} parent=43 // pred_region
          %313 = dma.done [#allocation10], 128
        $region60: #{tpu_custom_call.1} parent=43 // pred_fallthru
          _
        // Predicated region
        $region61: #{tpu_custom_call.1} parent=43 // pred_check
          %p314 = pneg %p137
        $region62: #{tpu_custom_call.1} parent=43 // pred_check_branch
          %316 = sbr.rel (%p314) target = $region64
        $region63: #{tpu_custom_call.1} parent=43 // pred_region
          %317 = dma.done [#allocation10], 4096
        $region64: #{tpu_custom_call.1} parent=43 // pred_fallthru
          _
        %s318 = sand.u32 %s35, 1
        %s319 = scalar_lea.sflag [#allocation4], %s318
        %s320 = sand.u32 %s35, 1
        %s321 = smul.addr %s320, 8
        %s322 = scalar_lea.vmem [#allocation3], %s321
        %p323 = pneg %p48
        %p324 = pneg %p45
        %s325 = sand.u32 %s27, 1
        %s326 = scalar_lea.sflag [#allocation7], %s325
        %s327 = sand.u32 %s61, 1
        %s328 = smul.addr %s327, 2
        %s329 = scalar_lea.vmem [#allocation6], %s328
        %p330 = pneg %p74
        %p331 = pneg %p71
        %p332 = pneg %p95
        %p333 = pneg %p92
        %p334 = pneg %p116
        %p335 = pneg %p113
        %p336 = pneg %p137
        %p337 = pneg %p134
        %p338 = pneg %p158
        %p339 = pneg %p155
        %p340 = pneg %p184
        %p341 = pneg %p181
        %s342 = sand.u32 %s171, 1
        %s343 = scalar_lea.sflag [#allocation5], %s342
        %s344 = sand.u32 %s171, 1
        %s345 = smul.addr %s344, 8
        %s346 = scalar_lea.vmem [#allocation12], %s345
        %v347 = vld [vmem:[%s292] sm:$0xff]
        %v348 = vld [vmem:[%s301] sm:$0x3]
        %v349 = vunpack.c.0.s8 %v348
        %v350 = vcvt.s32.f32 %v349
        %vm351 = vcmp.gt.f32.partialorder %v350, 0.0
        %v352 = vsel %vm351, 1, 0
        %v353 = vcvt.s32.f32 %v352
        %v354 = vld [vmem:[#allocation8] sm:$0xff]
        %v355 = vld [vmem:[#allocation8 + $0x8] sm:$0xff]
        %v356 = vld [vmem:[#allocation8 + $0x10] sm:$0xff]
        %v357 = vld [vmem:[#allocation8 + $0x18] sm:$0xff]
        %vm358 = vcmask 130048
        %v360 = vsel %vm358, %v347, 0
        %362 = vmatprep.subr.mxu0 0.0
        %363 = vmatpush1.msra.mxu0 0.0
        %364 = vmatprep.subr.mxu0 0.0
        %365 = vmatpush1.msra.mxu0 0.0
        %366 = vmatprep.subr.mxu0 0.0
        %367 = vmatpush1.msra.mxu0 0.0
        %368 = vmatprep.subr.mxu0 0.0
        %369 = vmatpush1.msra.mxu0 0.0
        %370 = vmatprep.subr.mxu0 0.0
        %371 = vmatpush1.msra.mxu0 0.0
        %372 = vmatprep.subr.mxu0 0.0
        %373 = vmatpush1.msra.mxu0 0.0
        %374 = vmatprep.subr.mxu0 0.0
        %375 = vmatpush1.msra.mxu0 0.0
        %376 = vmatprep.subr.mxu0 0.0
        %377 = vmatpush1.msra.mxu0 0.0
        %378 = vmatprep.subr.mxu0 0.0
        %379 = vmatpush1.msra.mxu0 0.0
        %380 = vmatprep.subr.mxu0 0.0
        %381 = vmatpush1.msra.mxu0 0.0
        %382 = vmatprep.subr.mxu0 0.0
        %383 = vmatpush1.msra.mxu0 0.0
        %384 = vmatprep.subr.mxu0 0.0
        %385 = vmatpush1.msra.mxu0 0.0
        %386 = vmatprep.subr.mxu0 0.0
        %387 = vmatpush1.msra.mxu0 0.0
        %388 = vmatprep.subr.mxu0 0.0
        %389 = vmatpush1.msra.mxu0 0.0
        %390 = vmatprep.subr.mxu0 %v357
        %391 = vmatpush1.msra.mxu0 %v356
        %392 = vmatprep.subr.mxu0 %v355
        %393 = vmatpush1.msra.mxu0 %v354
        %394 = vmatprep.subr.mxu0 0.0
        %395 = vmatpush2.msra.mxu0 0.0
        %396 = vmatprep.subr.mxu0 0.0
        %397 = vmatpush2.msra.mxu0 0.0
        %398 = vmatprep.subr.mxu0 0.0
        %399 = vmatpush2.msra.mxu0 0.0
        %400 = vmatprep.subr.mxu0 0.0
        %401 = vmatpush2.msra.mxu0 0.0
        %402 = vmatprep.subr.mxu0 0.0
        %403 = vmatpush2.msra.mxu0 0.0
        %404 = vmatprep.subr.mxu0 0.0
        %405 = vmatpush2.msra.mxu0 0.0
        %406 = vmatprep.subr.mxu0 0.0
        %407 = vmatpush2.msra.mxu0 0.0
        %408 = vmatprep.subr.mxu0 0.0
        %409 = vmatpush2.msra.mxu0 0.0
        %410 = vmatprep.subr.mxu0 0.0
        %411 = vmatpush2.msra.mxu0 0.0
        %412 = vmatprep.subr.mxu0 0.0
        %413 = vmatpush2.msra.mxu0 0.0
        %414 = vmatprep.subr.mxu0 0.0
        %415 = vmatpush2.msra.mxu0 0.0
        %416 = vmatprep.subr.mxu0 0.0
        %417 = vmatpush2.msra.mxu0 0.0
        %418 = vmatprep.subr.mxu0 0.0
        %419 = vmatpush2.msra.mxu0 0.0
        %420 = vmatprep.subr.mxu0 0.0
        %421 = vmatpush2.msra.mxu0 0.0
        %422 = vmatprep.subr.mxu0 0.0
        %423 = vmatpush2.msra.mxu0 0.0
        %424 = vmatprep.subr.mxu0 0.0
        %425 = vmatpush2.msra.mxu0 0.0
        %426 = vmatprep.mubr.f32.mxu0 0.0
        %427 = vmatmul.mubr.f32.gmra.mxu0 %v360
        %v428 = vpop.f32.mrf.mxu0
        %v429 = vadd.f32 0.0, %v428
        %v430 = vpop.f32.mrf.mxu0
        %v431 = vadd.f32 0.0, %v430
        %432 = vdwg.mxu0
        %v433 = vld [vmem:[#allocation9] sm:$0x3]
        %v434 = vld [vmem:[#allocation9 + $0x2] sm:$0x3]
        %v435 = vld [vmem:[#allocation9 + $0x4] sm:$0x3]
        %v436 = vld [vmem:[#allocation9 + $0x6] sm:$0x3]
        %v437 = vlaneseq
        %v438 = vshrl.u32 %v437, 7
        %v439 = vsub.s32 0, %v438
        %v440 = vrot.slane %v433, %v439
        %v441 = vmul.f32 %v429, %v440
        %vm442 = vcmask 523264
        %v443 = vsel %vm442, %v441, 0.0
        %444 = vadd.xlane.f32.xlu0 %v443
        %v445 = vpop.xlane.xlu0 %444
        %v446 = vlaneseq
        %v447 = vshrl.u32 %v446, 7
        %v448 = vsub.s32 1, %v447
        %v449 = vrot.slane %v433, %v448
        %v450 = vmul.f32 %v429, %v449
        %v451 = vsel %vm442, %v450, 0.0
        %452 = vadd.xlane.f32.xlu0 %v451
        %v453 = vpop.xlane.xlu0 %452
        %454 = vxpose.xlu0.b32.start [1/16] %v453, 128
        %455 = vxpose.xlu0.b32.cont [2/16] 0.0, 128
        %456 = vxpose.xlu0.b32.cont [3/16] 0.0, 128
        %457 = vxpose.xlu0.b32.cont [4/16] 0.0, 128
        %458 = vxpose.xlu0.b32.cont [5/16] 0.0, 128
        %459 = vxpose.xlu0.b32.cont [6/16] 0.0, 128
        %460 = vxpose.xlu0.b32.cont [7/16] 0.0, 128
        %461 = vxpose.xlu0.b32.cont [8/16] 0.0, 128
        %462 = vxpose.xlu0.b32.cont [9/16] 0.0, 128
        %463 = vxpose.xlu0.b32.cont [10/16] 0.0, 128
        %464 = vxpose.xlu0.b32.cont [11/16] 0.0, 128
        %465 = vxpose.xlu0.b32.cont [12/16] 0.0, 128
        %466 = vxpose.xlu0.b32.cont [13/16] 0.0, 128
        %467 = vxpose.xlu0.b32.cont [14/16] 0.0, 128
        %468 = vxpose.xlu0.b32.cont [15/16] 0.0, 128
        %469 = vxpose.xlu0.b32.end [16/16] 0.0, 128
        %v470 = vpop.trf.xlu0
        %v471 = vpop.trf.xlu0
        %v472 = vpop.trf.xlu0
        %v473 = vpop.trf.xlu0
        %v474 = vpop.trf.xlu0
        %v475 = vpop.trf.xlu0
        %v476 = vpop.trf.xlu0
        %v477 = vpop.trf.xlu0
        %v478 = vpop.trf.xlu0
        %v479 = vpop.trf.xlu0
        %v480 = vpop.trf.xlu0
        %v481 = vpop.trf.xlu0
        %v482 = vpop.trf.xlu0
        %v483 = vpop.trf.xlu0
        %v484 = vpop.trf.xlu0
        %v485 = vpop.trf.xlu0
        %v486 = vlaneseq
        %v487 = vshrl.u32 %v486, 7
        %v488 = vsub.s32 0, %v487
        %v489 = vrot.slane %v470, %v488
        %v490 = vadd.f32 %v445, %v489
        %vm491 = vcmp.gt.f32.partialorder %v490, 0.0
        %v492 = vmul.f32 %v490, 0.2
        %v493 = vsel %vm491, %v490, %v492
        %vm494 = vcmask 64512
        %v495 = vsel %vm494, %v493, -inf
        %v496 = vrot.slane %v495, 4
        %v497 = vmax.f32 %v495, %v496
        %v498 = vrot.slane %v497, 2
        %v499 = vmax.f32 %v497, %v498
        %v500 = vrot.slane %v499, 1
        %v501 = vmax.f32 %v499, %v500
        %v502 = vsub.f32 %v493, %v501
        %v503 = vmul.f32 %v502, 1.442695
        %v504 = vpow.pop %v503
        %v505 = vmul.f32 %v504, %v353
        %v506 = vsel %vm494, %v505, 0.0
        %v507 = vrot.slane %v506, 4
        %v508 = vadd.f32 %v506, %v507
        %v509 = vrot.slane %v508, 2
        %v510 = vadd.f32 %v508, %v509
        %v511 = vrot.slane %v510, 1
        %v512 = vadd.f32 %v510, %v511
        %v513 = vrcp.pop %v512
        %v514 = vmul.f32 %v505, %v513
        %v516 = vsel %vm494, %v514, 0
        %518 = vmatprep.subr.mxu0 0.0
        %519 = vmatpush1.msra.mxu0 0.0
        %520 = vmatprep.subr.mxu0 0.0
        %521 = vmatpush1.msra.mxu0 0.0
        %522 = vmatprep.subr.mxu0 0.0
        %523 = vmatpush1.msra.mxu0 0.0
        %524 = vmatprep.subr.mxu0 0.0
        %525 = vmatpush1.msra.mxu0 0.0
        %526 = vmatprep.subr.mxu0 0.0
        %527 = vmatpush1.msra.mxu0 0.0
        %528 = vmatprep.subr.mxu0 0.0
        %529 = vmatpush1.msra.mxu0 0.0
        %530 = vmatprep.subr.mxu0 0.0
        %531 = vmatpush1.msra.mxu0 0.0
        %532 = vmatprep.subr.mxu0 0.0
        %533 = vmatpush1.msra.mxu0 0.0
        %534 = vmatprep.subr.mxu0 0.0
        %535 = vmatpush1.msra.mxu0 0.0
        %536 = vmatprep.subr.mxu0 0.0
        %537 = vmatpush1.msra.mxu0 0.0
        %538 = vmatprep.subr.mxu0 0.0
        %539 = vmatpush1.msra.mxu0 0.0
        %540 = vmatprep.subr.mxu0 0.0
        %541 = vmatpush1.msra.mxu0 0.0
        %542 = vmatprep.subr.mxu0 0.0
        %543 = vmatpush1.msra.mxu0 0.0
        %544 = vmatprep.subr.mxu0 0.0
        %545 = vmatpush1.msra.mxu0 0.0
        %546 = vmatprep.subr.mxu0 0.0
        %547 = vmatpush1.msra.mxu0 0.0
        %548 = vmatprep.subr.mxu0 0.0
        %549 = vmatpush1.msra.mxu0 %v429
        %550 = vmatprep.subr.mxu0 0.0
        %551 = vmatpush2.msra.mxu0 0.0
        %552 = vmatprep.subr.mxu0 0.0
        %553 = vmatpush2.msra.mxu0 0.0
        %554 = vmatprep.subr.mxu0 0.0
        %555 = vmatpush2.msra.mxu0 0.0
        %556 = vmatprep.subr.mxu0 0.0
        %557 = vmatpush2.msra.mxu0 0.0
        %558 = vmatprep.subr.mxu0 0.0
        %559 = vmatpush2.msra.mxu0 0.0
        %560 = vmatprep.subr.mxu0 0.0
        %561 = vmatpush2.msra.mxu0 0.0
        %562 = vmatprep.subr.mxu0 0.0
        %563 = vmatpush2.msra.mxu0 0.0
        %564 = vmatprep.subr.mxu0 0.0
        %565 = vmatpush2.msra.mxu0 0.0
        %566 = vmatprep.subr.mxu0 0.0
        %567 = vmatpush2.msra.mxu0 0.0
        %568 = vmatprep.subr.mxu0 0.0
        %569 = vmatpush2.msra.mxu0 0.0
        %570 = vmatprep.subr.mxu0 0.0
        %571 = vmatpush2.msra.mxu0 0.0
        %572 = vmatprep.subr.mxu0 0.0
        %573 = vmatpush2.msra.mxu0 0.0
        %574 = vmatprep.subr.mxu0 0.0
        %575 = vmatpush2.msra.mxu0 0.0
        %576 = vmatprep.subr.mxu0 0.0
        %577 = vmatpush2.msra.mxu0 0.0
        %578 = vmatprep.subr.mxu0 0.0
        %579 = vmatpush2.msra.mxu0 0.0
        %580 = vmatprep.subr.mxu0 0.0
        %581 = vmatpush2.msra.mxu0 0.0
        %582 = vmatprep.mubr.f32.mxu0 0.0
        %583 = vmatmul.mubr.f32.gmra.mxu0 %v516
        %v584 = vpop.f32.mrf.mxu0
        %v585 = vadd.f32 0.0, %v584
        %v586 = vpop.f32.mrf.mxu0
        %587 = vdwg.mxu0
        %vm588 = vcmp.gt.f32.partialorder %v585, 0.0
        %v589 = vmin.f32 %v585, 0.0
        %v590 = vmul.f32 %v589, 1.442695
        %v591 = vpow.pop %v590
        %v592 = vsub.f32 %v591, 1.0
        %v593 = vsel %vm588, %v585, %v592
        %594 = vst.msk [vmem:[#allocation2] sm:$0xff] %vm442, %v593
        %v595 = vlaneseq
        %v596 = vshrl.u32 %v595, 7
        %v597 = vsub.s32 0, %v596
        %v598 = vrot.slane %v434, %v597
        %600 = vrot.lane.b32.xlu0 %v598, 64
        %v601 = vpop.permute.xlu0 %600
        %v603 = vmul.f32 %v429, %v601
        %605 = vrot.lane.b32.xlu0 %v603, 64
        %v606 = vpop.permute.xlu0 %605
        %v608 = vsel %vm442, %v606, 0.0
        %609 = vadd.xlane.f32.xlu0 %v608
        %v610 = vpop.xlane.xlu0 %609
        %v611 = vlaneseq
        %v612 = vshrl.u32 %v611, 7
        %v613 = vsub.s32 1, %v612
        %v614 = vrot.slane %v434, %v613
        %616 = vrot.lane.b32.xlu0 %v614, 64
        %v617 = vpop.permute.xlu0 %616
        %v619 = vmul.f32 %v429, %v617
        %621 = vrot.lane.b32.xlu0 %v619, 64
        %v622 = vpop.permute.xlu0 %621
        %v624 = vsel %vm442, %v622, 0.0
        %625 = vadd.xlane.f32.xlu0 %v624
        %v626 = vpop.xlane.xlu0 %625
        %627 = vxpose.xlu0.b32.start [1/16] %v626, 128
        %628 = vxpose.xlu0.b32.cont [2/16] 0.0, 128
        %629 = vxpose.xlu0.b32.cont [3/16] 0.0, 128
        %630 = vxpose.xlu0.b32.cont [4/16] 0.0, 128
        %631 = vxpose.xlu0.b32.cont [5/16] 0.0, 128
        %632 = vxpose.xlu0.b32.cont [6/16] 0.0, 128
        %633 = vxpose.xlu0.b32.cont [7/16] 0.0, 128
        %634 = vxpose.xlu0.b32.cont [8/16] 0.0, 128
        %635 = vxpose.xlu0.b32.cont [9/16] 0.0, 128
        %636 = vxpose.xlu0.b32.cont [10/16] 0.0, 128
        %637 = vxpose.xlu0.b32.cont [11/16] 0.0, 128
        %638 = vxpose.xlu0.b32.cont [12/16] 0.0, 128
        %639 = vxpose.xlu0.b32.cont [13/16] 0.0, 128
        %640 = vxpose.xlu0.b32.cont [14/16] 0.0, 128
        %641 = vxpose.xlu0.b32.cont [15/16] 0.0, 128
        %642 = vxpose.xlu0.b32.end [16/16] 0.0, 128
        %v643 = vpop.trf.xlu0
        %v644 = vpop.trf.xlu0
        %v645 = vpop.trf.xlu0
        %v646 = vpop.trf.xlu0
        %v647 = vpop.trf.xlu0
        %v648 = vpop.trf.xlu0
        %v649 = vpop.trf.xlu0
        %v650 = vpop.trf.xlu0
        %v651 = vpop.trf.xlu0
        %v652 = vpop.trf.xlu0
        %v653 = vpop.trf.xlu0
        %v654 = vpop.trf.xlu0
        %v655 = vpop.trf.xlu0
        %v656 = vpop.trf.xlu0
        %v657 = vpop.trf.xlu0
        %v658 = vpop.trf.xlu0
        %v659 = vlaneseq
        %v660 = vshrl.u32 %v659, 7
        %v661 = vsub.s32 0, %v660
        %v662 = vrot.slane %v643, %v661
        %v663 = vadd.f32 %v610, %v662
        %vm664 = vcmp.gt.f32.partialorder %v663, 0.0
        %v665 = vmul.f32 %v663, 0.2
        %v666 = vsel %vm664, %v663, %v665
        %v667 = vsel %vm494, %v666, -inf
        %v668 = vrot.slane %v667, 4
        %v669 = vmax.f32 %v667, %v668
        %v670 = vrot.slane %v669, 2
        %v671 = vmax.f32 %v669, %v670
        %v672 = vrot.slane %v671, 1
        %v673 = vmax.f32 %v671, %v672
        %v674 = vsub.f32 %v666, %v673
        %v675 = vmul.f32 %v674, 1.442695
        %v676 = vpow.pop %v675
        %v677 = vmul.f32 %v676, %v353
        %v678 = vsel %vm494, %v677, 0.0
        %v679 = vrot.slane %v678, 4
        %v680 = vadd.f32 %v678, %v679
        %v681 = vrot.slane %v680, 2
        %v682 = vadd.f32 %v680, %v681
        %v683 = vrot.slane %v682, 1
        %v684 = vadd.f32 %v682, %v683
        %v685 = vrcp.pop %v684
        %v686 = vmul.f32 %v677, %v685
        %688 = vrot.lane.b32.xlu0 %v429, 64
        %v689 = vpop.permute.xlu0 %688
        %v692 = vsel %vm494, %v686, 0
        %694 = vmatprep.subr.mxu0 0.0
        %695 = vmatpush1.msra.mxu0 0.0
        %696 = vmatprep.subr.mxu0 0.0
        %697 = vmatpush1.msra.mxu0 0.0
        %698 = vmatprep.subr.mxu0 0.0
        %699 = vmatpush1.msra.mxu0 0.0
        %700 = vmatprep.subr.mxu0 0.0
        %701 = vmatpush1.msra.mxu0 0.0
        %702 = vmatprep.subr.mxu0 0.0
        %703 = vmatpush1.msra.mxu0 0.0
        %704 = vmatprep.subr.mxu0 0.0
        %705 = vmatpush1.msra.mxu0 0.0
        %706 = vmatprep.subr.mxu0 0.0
        %707 = vmatpush1.msra.mxu0 0.0
        %708 = vmatprep.subr.mxu0 0.0
        %709 = vmatpush1.msra.mxu0 0.0
        %710 = vmatprep.subr.mxu0 0.0
        %711 = vmatpush1.msra.mxu0 0.0
        %712 = vmatprep.subr.mxu0 0.0
        %713 = vmatpush1.msra.mxu0 0.0
        %714 = vmatprep.subr.mxu0 0.0
        %715 = vmatpush1.msra.mxu0 0.0
        %716 = vmatprep.subr.mxu0 0.0
        %717 = vmatpush1.msra.mxu0 0.0
        %718 = vmatprep.subr.mxu0 0.0
        %719 = vmatpush1.msra.mxu0 0.0
        %720 = vmatprep.subr.mxu0 0.0
        %721 = vmatpush1.msra.mxu0 0.0
        %722 = vmatprep.subr.mxu0 0.0
        %723 = vmatpush1.msra.mxu0 0.0
        %724 = vmatprep.subr.mxu0 0.0
        %725 = vmatpush1.msra.mxu0 %v689
        %726 = vmatprep.subr.mxu0 0.0
        %727 = vmatpush2.msra.mxu0 0.0
        %728 = vmatprep.subr.mxu0 0.0
        %729 = vmatpush2.msra.mxu0 0.0
        %730 = vmatprep.subr.mxu0 0.0
        %731 = vmatpush2.msra.mxu0 0.0
        %732 = vmatprep.subr.mxu0 0.0
        %733 = vmatpush2.msra.mxu0 0.0
        %734 = vmatprep.subr.mxu0 0.0
        %735 = vmatpush2.msra.mxu0 0.0
        %736 = vmatprep.subr.mxu0 0.0
        %737 = vmatpush2.msra.mxu0 0.0
        %738 = vmatprep.subr.mxu0 0.0
        %739 = vmatpush2.msra.mxu0 0.0
        %740 = vmatprep.subr.mxu0 0.0
        %741 = vmatpush2.msra.mxu0 0.0
        %742 = vmatprep.subr.mxu0 0.0
        %743 = vmatpush2.msra.mxu0 0.0
        %744 = vmatprep.subr.mxu0 0.0
        %745 = vmatpush2.msra.mxu0 0.0
        %746 = vmatprep.subr.mxu0 0.0
        %747 = vmatpush2.msra.mxu0 0.0
        %748 = vmatprep.subr.mxu0 0.0
        %749 = vmatpush2.msra.mxu0 0.0
        %750 = vmatprep.subr.mxu0 0.0
        %751 = vmatpush2.msra.mxu0 0.0
        %752 = vmatprep.subr.mxu0 0.0
        %753 = vmatpush2.msra.mxu0 0.0
        %754 = vmatprep.subr.mxu0 0.0
        %755 = vmatpush2.msra.mxu0 0.0
        %756 = vmatprep.subr.mxu0 0.0
        %757 = vmatpush2.msra.mxu0 0.0
        %758 = vmatprep.mubr.f32.mxu0 0.0
        %759 = vmatmul.mubr.f32.gmra.mxu0 %v692
        %v760 = vpop.f32.mrf.mxu0
        %v761 = vadd.f32 0.0, %v760
        %v762 = vpop.f32.mrf.mxu0
        %763 = vdwg.mxu0
        %vm764 = vcmp.gt.f32.partialorder %v761, 0.0
        %v765 = vmin.f32 %v761, 0.0
        %v766 = vmul.f32 %v765, 1.442695
        %v767 = vpow.pop %v766
        %v768 = vsub.f32 %v767, 1.0
        %v769 = vsel %vm764, %v761, %v768
        %771 = vrot.lane.b32.xlu0 %v769, 64
        %v772 = vpop.permute.xlu0 %771
        %vm774 = vcmask 1048064
        %775 = vst.msk [vmem:[#allocation2] sm:$0xff] %vm774, %v772
        %v776 = vlaneseq
        %v777 = vshrl.u32 %v776, 7
        %v778 = vsub.s32 0, %v777
        %v779 = vrot.slane %v435, %v778
        %v780 = vmul.f32 %v431, %v779
        %v781 = vsel %vm442, %v780, 0.0
        %782 = vadd.xlane.f32.xlu0 %v781
        %v783 = vpop.xlane.xlu0 %782
        %v784 = vlaneseq
        %v785 = vshrl.u32 %v784, 7
        %v786 = vsub.s32 1, %v785
        %v787 = vrot.slane %v435, %v786
        %v788 = vmul.f32 %v431, %v787
        %v789 = vsel %vm442, %v788, 0.0
        %790 = vadd.xlane.f32.xlu0 %v789
        %v791 = vpop.xlane.xlu0 %790
        %792 = vxpose.xlu0.b32.start [1/16] %v791, 128
        %793 = vxpose.xlu0.b32.cont [2/16] 0.0, 128
        %794 = vxpose.xlu0.b32.cont [3/16] 0.0, 128
        %795 = vxpose.xlu0.b32.cont [4/16] 0.0, 128
        %796 = vxpose.xlu0.b32.cont [5/16] 0.0, 128
        %797 = vxpose.xlu0.b32.cont [6/16] 0.0, 128
        %798 = vxpose.xlu0.b32.cont [7/16] 0.0, 128
        %799 = vxpose.xlu0.b32.cont [8/16] 0.0, 128
        %800 = vxpose.xlu0.b32.cont [9/16] 0.0, 128
        %801 = vxpose.xlu0.b32.cont [10/16] 0.0, 128
        %802 = vxpose.xlu0.b32.cont [11/16] 0.0, 128
        %803 = vxpose.xlu0.b32.cont [12/16] 0.0, 128
        %804 = vxpose.xlu0.b32.cont [13/16] 0.0, 128
        %805 = vxpose.xlu0.b32.cont [14/16] 0.0, 128
        %806 = vxpose.xlu0.b32.cont [15/16] 0.0, 128
        %807 = vxpose.xlu0.b32.end [16/16] 0.0, 128
        %v808 = vpop.trf.xlu0
        %v809 = vpop.trf.xlu0
        %v810 = vpop.trf.xlu0
        %v811 = vpop.trf.xlu0
        %v812 = vpop.trf.xlu0
        %v813 = vpop.trf.xlu0
        %v814 = vpop.trf.xlu0
        %v815 = vpop.trf.xlu0
        %v816 = vpop.trf.xlu0
        %v817 = vpop.trf.xlu0
        %v818 = vpop.trf.xlu0
        %v819 = vpop.trf.xlu0
        %v820 = vpop.trf.xlu0
        %v821 = vpop.trf.xlu0
        %v822 = vpop.trf.xlu0
        %v823 = vpop.trf.xlu0
        %v824 = vlaneseq
        %v825 = vshrl.u32 %v824, 7
        %v826 = vsub.s32 0, %v825
        %v827 = vrot.slane %v808, %v826
        %v828 = vadd.f32 %v783, %v827
        %vm829 = vcmp.gt.f32.partialorder %v828, 0.0
        %v830 = vmul.f32 %v828, 0.2
        %v831 = vsel %vm829, %v828, %v830
        %v832 = vsel %vm494, %v831, -inf
        %v833 = vrot.slane %v832, 4
        %v834 = vmax.f32 %v832, %v833
        %v835 = vrot.slane %v834, 2
        %v836 = vmax.f32 %v834, %v835
        %v837 = vrot.slane %v836, 1
        %v838 = vmax.f32 %v836, %v837
        %v839 = vsub.f32 %v831, %v838
        %v840 = vmul.f32 %v839, 1.442695
        %v841 = vpow.pop %v840
        %v842 = vmul.f32 %v841, %v353
        %v843 = vsel %vm494, %v842, 0.0
        %v844 = vrot.slane %v843, 4
        %v845 = vadd.f32 %v843, %v844
        %v846 = vrot.slane %v845, 2
        %v847 = vadd.f32 %v845, %v846
        %v848 = vrot.slane %v847, 1
        %v849 = vadd.f32 %v847, %v848
        %v850 = vrcp.pop %v849
        %v851 = vmul.f32 %v842, %v850
        %v853 = vsel %vm494, %v851, 0
        %855 = vmatprep.subr.mxu0 0.0
        %856 = vmatpush1.msra.mxu0 0.0
        %857 = vmatprep.subr.mxu0 0.0
        %858 = vmatpush1.msra.mxu0 0.0
        %859 = vmatprep.subr.mxu0 0.0
        %860 = vmatpush1.msra.mxu0 0.0
        %861 = vmatprep.subr.mxu0 0.0
        %862 = vmatpush1.msra.mxu0 0.0
        %863 = vmatprep.subr.mxu0 0.0
        %864 = vmatpush1.msra.mxu0 0.0
        %865 = vmatprep.subr.mxu0 0.0
        %866 = vmatpush1.msra.mxu0 0.0
        %867 = vmatprep.subr.mxu0 0.0
        %868 = vmatpush1.msra.mxu0 0.0
        %869 = vmatprep.subr.mxu0 0.0
        %870 = vmatpush1.msra.mxu0 0.0
        %871 = vmatprep.subr.mxu0 0.0
        %872 = vmatpush1.msra.mxu0 0.0
        %873 = vmatprep.subr.mxu0 0.0
        %874 = vmatpush1.msra.mxu0 0.0
        %875 = vmatprep.subr.mxu0 0.0
        %876 = vmatpush1.msra.mxu0 0.0
        %877 = vmatprep.subr.mxu0 0.0
        %878 = vmatpush1.msra.mxu0 0.0
        %879 = vmatprep.subr.mxu0 0.0
        %880 = vmatpush1.msra.mxu0 0.0
        %881 = vmatprep.subr.mxu0 0.0
        %882 = vmatpush1.msra.mxu0 0.0
        %883 = vmatprep.subr.mxu0 0.0
        %884 = vmatpush1.msra.mxu0 0.0
        %885 = vmatprep.subr.mxu0 0.0
        %886 = vmatpush1.msra.mxu0 %v431
        %887 = vmatprep.subr.mxu0 0.0
        %888 = vmatpush2.msra.mxu0 0.0
        %889 = vmatprep.subr.mxu0 0.0
        %890 = vmatpush2.msra.mxu0 0.0
        %891 = vmatprep.subr.mxu0 0.0
        %892 = vmatpush2.msra.mxu0 0.0
        %893 = vmatprep.subr.mxu0 0.0
        %894 = vmatpush2.msra.mxu0 0.0
        %895 = vmatprep.subr.mxu0 0.0
        %896 = vmatpush2.msra.mxu0 0.0
        %897 = vmatprep.subr.mxu0 0.0
        %898 = vmatpush2.msra.mxu0 0.0
        %899 = vmatprep.subr.mxu0 0.0
        %900 = vmatpush2.msra.mxu0 0.0
        %901 = vmatprep.subr.mxu0 0.0
        %902 = vmatpush2.msra.mxu0 0.0
        %903 = vmatprep.subr.mxu0 0.0
        %904 = vmatpush2.msra.mxu0 0.0
        %905 = vmatprep.subr.mxu0 0.0
        %906 = vmatpush2.msra.mxu0 0.0
        %907 = vmatprep.subr.mxu0 0.0
        %908 = vmatpush2.msra.mxu0 0.0
        %909 = vmatprep.subr.mxu0 0.0
        %910 = vmatpush2.msra.mxu0 0.0
        %911 = vmatprep.subr.mxu0 0.0
        %912 = vmatpush2.msra.mxu0 0.0
        %913 = vmatprep.subr.mxu0 0.0
        %914 = vmatpush2.msra.mxu0 0.0
        %915 = vmatprep.subr.mxu0 0.0
        %916 = vmatpush2.msra.mxu0 0.0
        %917 = vmatprep.subr.mxu0 0.0
        %918 = vmatpush2.msra.mxu0 0.0
        %919 = vmatprep.mubr.f32.mxu0 0.0
        %920 = vmatmul.mubr.f32.gmra.mxu0 %v853
        %v921 = vpop.f32.mrf.mxu0
        %v922 = vadd.f32 0.0, %v921
        %v923 = vpop.f32.mrf.mxu0
        %924 = vdwg.mxu0
        %vm925 = vcmp.gt.f32.partialorder %v922, 0.0
        %v926 = vmin.f32 %v922, 0.0
        %v927 = vmul.f32 %v926, 1.442695
        %v928 = vpow.pop %v927
        %v929 = vsub.f32 %v928, 1.0
        %v930 = vsel %vm925, %v922, %v929
        %931 = vst.msk [vmem:[#allocation2 + $0x8] sm:$0xff] %vm442, %v930
        %v932 = vlaneseq
        %v933 = vshrl.u32 %v932, 7
        %v934 = vsub.s32 0, %v933
        %v935 = vrot.slane %v436, %v934
        %937 = vrot.lane.b32.xlu0 %v935, 64
        %v938 = vpop.permute.xlu0 %937
        %v940 = vmul.f32 %v431, %v938
        %942 = vrot.lane.b32.xlu0 %v940, 64
        %v943 = vpop.permute.xlu0 %942
        %v945 = vsel %vm442, %v943, 0.0
        %946 = vadd.xlane.f32.xlu0 %v945
        %v947 = vpop.xlane.xlu0 %946
        %v948 = vlaneseq
        %v949 = vshrl.u32 %v948, 7
        %v950 = vsub.s32 1, %v949
        %v951 = vrot.slane %v436, %v950
        %953 = vrot.lane.b32.xlu0 %v951, 64
        %v954 = vpop.permute.xlu0 %953
        %v956 = vmul.f32 %v431, %v954
        %958 = vrot.lane.b32.xlu0 %v956, 64
        %v959 = vpop.permute.xlu0 %958
        %v961 = vsel %vm442, %v959, 0.0
        %962 = vadd.xlane.f32.xlu0 %v961
        %v963 = vpop.xlane.xlu0 %962
        %964 = vxpose.xlu0.b32.start [1/16] %v963, 128
        %965 = vxpose.xlu0.b32.cont [2/16] 0.0, 128
        %966 = vxpose.xlu0.b32.cont [3/16] 0.0, 128
        %967 = vxpose.xlu0.b32.cont [4/16] 0.0, 128
        %968 = vxpose.xlu0.b32.cont [5/16] 0.0, 128
        %969 = vxpose.xlu0.b32.cont [6/16] 0.0, 128
        %970 = vxpose.xlu0.b32.cont [7/16] 0.0, 128
        %971 = vxpose.xlu0.b32.cont [8/16] 0.0, 128
        %972 = vxpose.xlu0.b32.cont [9/16] 0.0, 128
        %973 = vxpose.xlu0.b32.cont [10/16] 0.0, 128
        %974 = vxpose.xlu0.b32.cont [11/16] 0.0, 128
        %975 = vxpose.xlu0.b32.cont [12/16] 0.0, 128
        %976 = vxpose.xlu0.b32.cont [13/16] 0.0, 128
        %977 = vxpose.xlu0.b32.cont [14/16] 0.0, 128
        %978 = vxpose.xlu0.b32.cont [15/16] 0.0, 128
        %979 = vxpose.xlu0.b32.end [16/16] 0.0, 128
        %v980 = vpop.trf.xlu0
        %v981 = vpop.trf.xlu0
        %v982 = vpop.trf.xlu0
        %v983 = vpop.trf.xlu0
        %v984 = vpop.trf.xlu0
        %v985 = vpop.trf.xlu0
        %v986 = vpop.trf.xlu0
        %v987 = vpop.trf.xlu0
        %v988 = vpop.trf.xlu0
        %v989 = vpop.trf.xlu0
        %v990 = vpop.trf.xlu0
        %v991 = vpop.trf.xlu0
        %v992 = vpop.trf.xlu0
        %v993 = vpop.trf.xlu0
        %v994 = vpop.trf.xlu0
        %v995 = vpop.trf.xlu0
        %v996 = vlaneseq
        %v997 = vshrl.u32 %v996, 7
        %v998 = vsub.s32 0, %v997
        %v999 = vrot.slane %v980, %v998
        %v1000 = vadd.f32 %v947, %v999
        %vm1001 = vcmp.gt.f32.partialorder %v1000, 0.0
        %v1002 = vmul.f32 %v1000, 0.2
        %v1003 = vsel %vm1001, %v1000, %v1002
        %v1004 = vsel %vm494, %v1003, -inf
        %v1005 = vrot.slane %v1004, 4
        %v1006 = vmax.f32 %v1004, %v1005
        %v1007 = vrot.slane %v1006, 2
        %v1008 = vmax.f32 %v1006, %v1007
        %v1009 = vrot.slane %v1008, 1
        %v1010 = vmax.f32 %v1008, %v1009
        %v1011 = vsub.f32 %v1003, %v1010
        %v1012 = vmul.f32 %v1011, 1.442695
        %v1013 = vpow.pop %v1012
        %v1014 = vmul.f32 %v1013, %v353
        %v1015 = vsel %vm494, %v1014, 0.0
        %v1016 = vrot.slane %v1015, 4
        %v1017 = vadd.f32 %v1015, %v1016
        %v1018 = vrot.slane %v1017, 2
        %v1019 = vadd.f32 %v1017, %v1018
        %v1020 = vrot.slane %v1019, 1
        %v1021 = vadd.f32 %v1019, %v1020
        %v1022 = vrcp.pop %v1021
        %v1023 = vmul.f32 %v1014, %v1022
        %1025 = vrot.lane.b32.xlu0 %v431, 64
        %v1026 = vpop.permute.xlu0 %1025
        %v1029 = vsel %vm494, %v1023, 0
        %1031 = vmatprep.subr.mxu0 0.0
        %1032 = vmatpush1.msra.mxu0 0.0
        %1033 = vmatprep.subr.mxu0 0.0
        %1034 = vmatpush1.msra.mxu0 0.0
        %1035 = vmatprep.subr.mxu0 0.0
        %1036 = vmatpush1.msra.mxu0 0.0
        %1037 = vmatprep.subr.mxu0 0.0
        %1038 = vmatpush1.msra.mxu0 0.0
        %1039 = vmatprep.subr.mxu0 0.0
        %1040 = vmatpush1.msra.mxu0 0.0
        %1041 = vmatprep.subr.mxu0 0.0
        %1042 = vmatpush1.msra.mxu0 0.0
        %1043 = vmatprep.subr.mxu0 0.0
        %1044 = vmatpush1.msra.mxu0 0.0
        %1045 = vmatprep.subr.mxu0 0.0
        %1046 = vmatpush1.msra.mxu0 0.0
        %1047 = vmatprep.subr.mxu0 0.0
        %1048 = vmatpush1.msra.mxu0 0.0
        %1049 = vmatprep.subr.mxu0 0.0
        %1050 = vmatpush1.msra.mxu0 0.0
        %1051 = vmatprep.subr.mxu0 0.0
        %1052 = vmatpush1.msra.mxu0 0.0
        %1053 = vmatprep.subr.mxu0 0.0
        %1054 = vmatpush1.msra.mxu0 0.0
        %1055 = vmatprep.subr.mxu0 0.0
        %1056 = vmatpush1.msra.mxu0 0.0
        %1057 = vmatprep.subr.mxu0 0.0
        %1058 = vmatpush1.msra.mxu0 0.0
        %1059 = vmatprep.subr.mxu0 0.0
        %1060 = vmatpush1.msra.mxu0 0.0
        %1061 = vmatprep.subr.mxu0 0.0
        %1062 = vmatpush1.msra.mxu0 %v1026
        %1063 = vmatprep.subr.mxu0 0.0
        %1064 = vmatpush2.msra.mxu0 0.0
        %1065 = vmatprep.subr.mxu0 0.0
        %1066 = vmatpush2.msra.mxu0 0.0
        %1067 = vmatprep.subr.mxu0 0.0
        %1068 = vmatpush2.msra.mxu0 0.0
        %1069 = vmatprep.subr.mxu0 0.0
        %1070 = vmatpush2.msra.mxu0 0.0
        %1071 = vmatprep.subr.mxu0 0.0
        %1072 = vmatpush2.msra.mxu0 0.0
        %1073 = vmatprep.subr.mxu0 0.0
        %1074 = vmatpush2.msra.mxu0 0.0
        %1075 = vmatprep.subr.mxu0 0.0
        %1076 = vmatpush2.msra.mxu0 0.0
        %1077 = vmatprep.subr.mxu0 0.0
        %1078 = vmatpush2.msra.mxu0 0.0
        %1079 = vmatprep.subr.mxu0 0.0
        %1080 = vmatpush2.msra.mxu0 0.0
        %1081 = vmatprep.subr.mxu0 0.0
        %1082 = vmatpush2.msra.mxu0 0.0
        %1083 = vmatprep.subr.mxu0 0.0
        %1084 = vmatpush2.msra.mxu0 0.0
        %1085 = vmatprep.subr.mxu0 0.0
        %1086 = vmatpush2.msra.mxu0 0.0
        %1087 = vmatprep.subr.mxu0 0.0
        %1088 = vmatpush2.msra.mxu0 0.0
        %1089 = vmatprep.subr.mxu0 0.0
        %1090 = vmatpush2.msra.mxu0 0.0
        %1091 = vmatprep.subr.mxu0 0.0
        %1092 = vmatpush2.msra.mxu0 0.0
        %1093 = vmatprep.subr.mxu0 0.0
        %1094 = vmatpush2.msra.mxu0 0.0
        %1095 = vmatprep.mubr.f32.mxu0 0.0
        %1096 = vmatmul.mubr.f32.gmra.mxu0 %v1029
        %v1097 = vpop.f32.mrf.mxu0
        %v1098 = vadd.f32 0.0, %v1097
        %v1099 = vpop.f32.mrf.mxu0
        %1100 = vdwg.mxu0
        %vm1101 = vcmp.gt.f32.partialorder %v1098, 0.0
        %v1102 = vmin.f32 %v1098, 0.0
        %v1103 = vmul.f32 %v1102, 1.442695
        %v1104 = vpow.pop %v1103
        %v1105 = vsub.f32 %v1104, 1.0
        %v1106 = vsel %vm1101, %v1098, %v1105
        %1108 = vrot.lane.b32.xlu0 %v1106, 64
        %v1109 = vpop.permute.xlu0 %1108
        %1111 = vst.msk [vmem:[#allocation2 + $0x8] sm:$0xff] %vm774, %v1109
        %v1112 = vld [vmem:[#allocation2] sm:$0xff]
        %v1113 = vld [vmem:[#allocation2 + $0x8] sm:$0xff]
        %v1114 = vld [vmem:[#allocation11] sm:$0xff]
        %v1115 = vld [vmem:[#allocation11 + $0x8] sm:$0xff]
        %v1116 = vld [vmem:[#allocation11 + $0x10] sm:$0xff]
        %v1117 = vld [vmem:[#allocation11 + $0x18] sm:$0xff]
        %v1118 = vld [vmem:[#allocation11 + $0x20] sm:$0xff]
        %v1119 = vld [vmem:[#allocation11 + $0x28] sm:$0xff]
        %v1120 = vld [vmem:[#allocation11 + $0x30] sm:$0xff]
        %v1121 = vld [vmem:[#allocation11 + $0x38] sm:$0xff]
        %v1122 = vld [vmem:[#allocation11 + $0x40] sm:$0xff]
        %v1123 = vld [vmem:[#allocation11 + $0x48] sm:$0xff]
        %v1124 = vld [vmem:[#allocation11 + $0x50] sm:$0xff]
        %v1125 = vld [vmem:[#allocation11 + $0x58] sm:$0xff]
        %v1126 = vld [vmem:[#allocation11 + $0x60] sm:$0xff]
        %v1127 = vld [vmem:[#allocation11 + $0x68] sm:$0xff]
        %v1128 = vld [vmem:[#allocation11 + $0x70] sm:$0xff]
        %v1129 = vld [vmem:[#allocation11 + $0x78] sm:$0xff]
        %v1130 = vld [vmem:[#allocation11 + $0x80] sm:$0xff]
        %v1131 = vld [vmem:[#allocation11 + $0x88] sm:$0xff]
        %v1132 = vld [vmem:[#allocation11 + $0x90] sm:$0xff]
        %v1133 = vld [vmem:[#allocation11 + $0x98] sm:$0xff]
        %v1134 = vld [vmem:[#allocation11 + $0xa0] sm:$0xff]
        %v1135 = vld [vmem:[#allocation11 + $0xa8] sm:$0xff]
        %v1136 = vld [vmem:[#allocation11 + $0xb0] sm:$0xff]
        %v1137 = vld [vmem:[#allocation11 + $0xb8] sm:$0xff]
        %v1138 = vld [vmem:[#allocation11 + $0xc0] sm:$0xff]
        %v1139 = vld [vmem:[#allocation11 + $0xc8] sm:$0xff]
        %v1140 = vld [vmem:[#allocation11 + $0xd0] sm:$0xff]
        %v1141 = vld [vmem:[#allocation11 + $0xd8] sm:$0xff]
        %v1142 = vld [vmem:[#allocation11 + $0xe0] sm:$0xff]
        %v1143 = vld [vmem:[#allocation11 + $0xe8] sm:$0xff]
        %v1144 = vld [vmem:[#allocation11 + $0xf0] sm:$0xff]
        %v1145 = vld [vmem:[#allocation11 + $0xf8] sm:$0xff]
        %1146 = vmatprep.subr.mxu0 0.0
        %1147 = vmatpush1.msra.mxu0 %v1129
        %1148 = vmatprep.subr.mxu0 0.0
        %1149 = vmatpush1.msra.mxu0 %v1128
        %1150 = vmatprep.subr.mxu0 0.0
        %1151 = vmatpush1.msra.mxu0 %v1127
        %1152 = vmatprep.subr.mxu0 0.0
        %1153 = vmatpush1.msra.mxu0 %v1126
        %1154 = vmatprep.subr.mxu0 0.0
        %1155 = vmatpush1.msra.mxu0 %v1125
        %1156 = vmatprep.subr.mxu0 0.0
        %1157 = vmatpush1.msra.mxu0 %v1124
        %1158 = vmatprep.subr.mxu0 0.0
        %1159 = vmatpush1.msra.mxu0 %v1123
        %1160 = vmatprep.subr.mxu0 0.0
        %1161 = vmatpush1.msra.mxu0 %v1122
        %1162 = vmatprep.subr.mxu0 0.0
        %1163 = vmatpush1.msra.mxu0 %v1121
        %1164 = vmatprep.subr.mxu0 0.0
        %1165 = vmatpush1.msra.mxu0 %v1120
        %1166 = vmatprep.subr.mxu0 0.0
        %1167 = vmatpush1.msra.mxu0 %v1119
        %1168 = vmatprep.subr.mxu0 0.0
        %1169 = vmatpush1.msra.mxu0 %v1118
        %1170 = vmatprep.subr.mxu0 0.0
        %1171 = vmatpush1.msra.mxu0 %v1117
        %1172 = vmatprep.subr.mxu0 0.0
        %1173 = vmatpush1.msra.mxu0 %v1116
        %1174 = vmatprep.subr.mxu0 0.0
        %1175 = vmatpush1.msra.mxu0 %v1115
        %1176 = vmatprep.subr.mxu0 0.0
        %1177 = vmatpush1.msra.mxu0 %v1114
        %1178 = vmatprep.subr.mxu0 0.0
        %1179 = vmatpush2.msra.mxu0 %v1145
        %1180 = vmatprep.subr.mxu0 0.0
        %1181 = vmatpush2.msra.mxu0 %v1144
        %1182 = vmatprep.subr.mxu0 0.0
        %1183 = vmatpush2.msra.mxu0 %v1143
        %1184 = vmatprep.subr.mxu0 0.0
        %1185 = vmatpush2.msra.mxu0 %v1142
        %1186 = vmatprep.subr.mxu0 0.0
        %1187 = vmatpush2.msra.mxu0 %v1141
        %1188 = vmatprep.subr.mxu0 0.0
        %1189 = vmatpush2.msra.mxu0 %v1140
        %1190 = vmatprep.subr.mxu0 0.0
        %1191 = vmatpush2.msra.mxu0 %v1139
        %1192 = vmatprep.subr.mxu0 0.0
        %1193 = vmatpush2.msra.mxu0 %v1138
        %1194 = vmatprep.subr.mxu0 0.0
        %1195 = vmatpush2.msra.mxu0 %v1137
        %1196 = vmatprep.subr.mxu0 0.0
        %1197 = vmatpush2.msra.mxu0 %v1136
        %1198 = vmatprep.subr.mxu0 0.0
        %1199 = vmatpush2.msra.mxu0 %v1135
        %1200 = vmatprep.subr.mxu0 0.0
        %1201 = vmatpush2.msra.mxu0 %v1134
        %1202 = vmatprep.subr.mxu0 0.0
        %1203 = vmatpush2.msra.mxu0 %v1133
        %1204 = vmatprep.subr.mxu0 0.0
        %1205 = vmatpush2.msra.mxu0 %v1132
        %1206 = vmatprep.subr.mxu0 0.0
        %1207 = vmatpush2.msra.mxu0 %v1131
        %1208 = vmatprep.subr.mxu0 0.0
        %1209 = vmatpush2.msra.mxu0 %v1130
        %1210 = vmatprep.mubr.f32.mxu0 %v1113
        %1211 = vmatmul.mubr.f32.gmra.mxu0 %v1112
        %v1212 = vpop.f32.mrf.mxu0
        %v1213 = vadd.f32 0.0, %v1212
        %v1214 = vpop.f32.mrf.mxu0
        %1215 = vdwg.mxu0
        %v1216 = vld [vmem:[%s5] sm:$0x3]
        %v1217 = vlaneseq
        %v1218 = vshrl.u32 %v1217, 7
        %v1219 = vsub.s32 0, %v1218
        %v1220 = vrot.slane %v1216, %v1219
        %v1221 = vmul.f32 %v1213, %v1220
        %1222 = vadd.xlane.f32.xlu0 %v1221
        %v1223 = vpop.xlane.xlu0 %1222
        %v1224 = vlaneseq
        %v1225 = vshrl.u32 %v1224, 7
        %v1226 = vsub.s32 1, %v1225
        %v1227 = vrot.slane %v1216, %v1226
        %v1228 = vmul.f32 %v1213, %v1227
        %1229 = vadd.xlane.f32.xlu0 %v1228
        %v1230 = vpop.xlane.xlu0 %1229
        %1231 = vxpose.xlu0.b32.start [1/16] %v1230, 128
        %1232 = vxpose.xlu0.b32.cont [2/16] 0.0, 128
        %1233 = vxpose.xlu0.b32.cont [3/16] 0.0, 128
        %1234 = vxpose.xlu0.b32.cont [4/16] 0.0, 128
        %1235 = vxpose.xlu0.b32.cont [5/16] 0.0, 128
        %1236 = vxpose.xlu0.b32.cont [6/16] 0.0, 128
        %1237 = vxpose.xlu0.b32.cont [7/16] 0.0, 128
        %1238 = vxpose.xlu0.b32.cont [8/16] 0.0, 128
        %1239 = vxpose.xlu0.b32.cont [9/16] 0.0, 128
        %1240 = vxpose.xlu0.b32.cont [10/16] 0.0, 128
        %1241 = vxpose.xlu0.b32.cont [11/16] 0.0, 128
        %1242 = vxpose.xlu0.b32.cont [12/16] 0.0, 128
        %1243 = vxpose.xlu0.b32.cont [13/16] 0.0, 128
        %1244 = vxpose.xlu0.b32.cont [14/16] 0.0, 128
        %1245 = vxpose.xlu0.b32.cont [15/16] 0.0, 128
        %1246 = vxpose.xlu0.b32.end [16/16] 0.0, 128
        %v1247 = vpop.trf.xlu0
        %v1248 = vpop.trf.xlu0
        %v1249 = vpop.trf.xlu0
        %v1250 = vpop.trf.xlu0
        %v1251 = vpop.trf.xlu0
        %v1252 = vpop.trf.xlu0
        %v1253 = vpop.trf.xlu0
        %v1254 = vpop.trf.xlu0
        %v1255 = vpop.trf.xlu0
        %v1256 = vpop.trf.xlu0
        %v1257 = vpop.trf.xlu0
        %v1258 = vpop.trf.xlu0
        %v1259 = vpop.trf.xlu0
        %v1260 = vpop.trf.xlu0
        %v1261 = vpop.trf.xlu0
        %v1262 = vpop.trf.xlu0
        %v1263 = vlaneseq
        %v1264 = vshrl.u32 %v1263, 7
        %v1265 = vsub.s32 0, %v1264
        %v1266 = vrot.slane %v1247, %v1265
        %v1267 = vadd.f32 %v1223, %v1266
        %vm1268 = vcmp.gt.f32.partialorder %v1267, 0.0
        %v1269 = vmul.f32 %v1267, 0.2
        %v1270 = vsel %vm1268, %v1267, %v1269
        %v1271 = vsel %vm494, %v1270, -inf
        %v1272 = vrot.slane %v1271, 4
        %v1273 = vmax.f32 %v1271, %v1272
        %v1274 = vrot.slane %v1273, 2
        %v1275 = vmax.f32 %v1273, %v1274
        %v1276 = vrot.slane %v1275, 1
        %v1277 = vmax.f32 %v1275, %v1276
        %v1278 = vsub.f32 %v1270, %v1277
        %v1279 = vmul.f32 %v1278, 1.442695
        %v1280 = vpow.pop %v1279
        %v1281 = vmul.f32 %v1280, %v353
        %v1282 = vsel %vm494, %v1281, 0.0
        %v1283 = vrot.slane %v1282, 4
        %v1284 = vadd.f32 %v1282, %v1283
        %v1285 = vrot.slane %v1284, 2
        %v1286 = vadd.f32 %v1284, %v1285
        %v1287 = vrot.slane %v1286, 1
        %v1288 = vadd.f32 %v1286, %v1287
        %v1289 = vrcp.pop %v1288
        %v1290 = vmul.f32 %v1281, %v1289
        %v1292 = vsel %vm494, %v1290, 0
        %1294 = vmatprep.subr.mxu0 0.0
        %1295 = vmatpush1.msra.mxu0 0.0
        %1296 = vmatprep.subr.mxu0 0.0
        %1297 = vmatpush1.msra.mxu0 0.0
        %1298 = vmatprep.subr.mxu0 0.0
        %1299 = vmatpush1.msra.mxu0 0.0
        %1300 = vmatprep.subr.mxu0 0.0
        %1301 = vmatpush1.msra.mxu0 0.0
        %1302 = vmatprep.subr.mxu0 0.0
        %1303 = vmatpush1.msra.mxu0 0.0
        %1304 = vmatprep.subr.mxu0 0.0
        %1305 = vmatpush1.msra.mxu0 0.0
        %1306 = vmatprep.subr.mxu0 0.0
        %1307 = vmatpush1.msra.mxu0 0.0
        %1308 = vmatprep.subr.mxu0 0.0
        %1309 = vmatpush1.msra.mxu0 0.0
        %1310 = vmatprep.subr.mxu0 0.0
        %1311 = vmatpush1.msra.mxu0 0.0
        %1312 = vmatprep.subr.mxu0 0.0
        %1313 = vmatpush1.msra.mxu0 0.0
        %1314 = vmatprep.subr.mxu0 0.0
        %1315 = vmatpush1.msra.mxu0 0.0
        %1316 = vmatprep.subr.mxu0 0.0
        %1317 = vmatpush1.msra.mxu0 0.0
        %1318 = vmatprep.subr.mxu0 0.0
        %1319 = vmatpush1.msra.mxu0 0.0
        %1320 = vmatprep.subr.mxu0 0.0
        %1321 = vmatpush1.msra.mxu0 0.0
        %1322 = vmatprep.subr.mxu0 0.0
        %1323 = vmatpush1.msra.mxu0 0.0
        %1324 = vmatprep.subr.mxu0 0.0
        %1325 = vmatpush1.msra.mxu0 %v1213
        %1326 = vmatprep.subr.mxu0 0.0
        %1327 = vmatpush2.msra.mxu0 0.0
        %1328 = vmatprep.subr.mxu0 0.0
        %1329 = vmatpush2.msra.mxu0 0.0
        %1330 = vmatprep.subr.mxu0 0.0
        %1331 = vmatpush2.msra.mxu0 0.0
        %1332 = vmatprep.subr.mxu0 0.0
        %1333 = vmatpush2.msra.mxu0 0.0
        %1334 = vmatprep.subr.mxu0 0.0
        %1335 = vmatpush2.msra.mxu0 0.0
        %1336 = vmatprep.subr.mxu0 0.0
        %1337 = vmatpush2.msra.mxu0 0.0
        %1338 = vmatprep.subr.mxu0 0.0
        %1339 = vmatpush2.msra.mxu0 0.0
        %1340 = vmatprep.subr.mxu0 0.0
        %1341 = vmatpush2.msra.mxu0 0.0
        %1342 = vmatprep.subr.mxu0 0.0
        %1343 = vmatpush2.msra.mxu0 0.0
        %1344 = vmatprep.subr.mxu0 0.0
        %1345 = vmatpush2.msra.mxu0 0.0
        %1346 = vmatprep.subr.mxu0 0.0
        %1347 = vmatpush2.msra.mxu0 0.0
        %1348 = vmatprep.subr.mxu0 0.0
        %1349 = vmatpush2.msra.mxu0 0.0
        %1350 = vmatprep.subr.mxu0 0.0
        %1351 = vmatpush2.msra.mxu0 0.0
        %1352 = vmatprep.subr.mxu0 0.0
        %1353 = vmatpush2.msra.mxu0 0.0
        %1354 = vmatprep.subr.mxu0 0.0
        %1355 = vmatpush2.msra.mxu0 0.0
        %1356 = vmatprep.subr.mxu0 0.0
        %1357 = vmatpush2.msra.mxu0 0.0
        %1358 = vmatprep.mubr.f32.mxu0 0.0
        %1359 = vmatmul.mubr.f32.gmra.mxu0 %v1292
        %v1360 = vpop.f32.mrf.mxu0
        %v1361 = vadd.f32 0.0, %v1360
        %v1362 = vpop.f32.mrf.mxu0
        %1363 = vdwg.mxu0
        %vm1364 = vcmp.gt.f32.partialorder %v1361, 0.0
        %v1365 = vmin.f32 %v1361, 0.0
        %v1366 = vmul.f32 %v1365, 1.442695
        %v1367 = vpow.pop %v1366
        %v1368 = vsub.f32 %v1367, 1.0
        %v1369 = vsel %vm1364, %v1361, %v1368
        %v1370 = vrot.slane %v1369, 4
        %v1371 = vmax.f32 %v1369, %v1370
        %v1372 = vrot.slane %v1371, 2
        %v1373 = vmax.f32 %v1371, %v1372
        %v1374 = vrot.slane %v1373, 1
        %v1375 = vmax.f32 %v1373, %v1374
        %v1376 = vsub.f32 %v1369, %v1375
        %v1377 = vmul.f32 %v1376, 1.442695
        %v1378 = vpow.pop %v1377
        %v1379 = vrot.slane %v1378, 4
        %v1380 = vadd.f32 %v1378, %v1379
        %v1381 = vrot.slane %v1380, 2
        %v1382 = vadd.f32 %v1380, %v1381
        %v1383 = vrot.slane %v1382, 1
        %v1384 = vadd.f32 %v1382, %v1383
        %v1385 = vlog2.pop %v1384
        %v1386 = vmul.f32 %v1385, 0.6931472
        %v1387 = vsub.f32 %v1376, %v1386
        %1388 = vst [vmem:[%s346] sm:$0xff] %v1387
        %s1389 = sand.u32 %s171, 1
        %s1390 = scalar_lea.sflag [#allocation5], %s1389
        %s1391 = sand.u32 %s171, 1
        %s1392 = smul.addr %s1391, 8
        %s1393 = scalar_lea.vmem [#allocation12], %s1392
        // Predicated region
        $region65: #{tpu_custom_call.1} parent=43 // pred_check
          %p1394 = pneg %p181
        $region66: #{tpu_custom_call.1} parent=43 // pred_check_branch
          %1396 = sbr.rel (%p1394) target = $region68
        $region67: #{tpu_custom_call.1} parent=43 // pred_region
          %s1398 = ssub.s32 128, 128
          %1399 = vsyncadd %s1390, %s1398
          %s1400 = smul.addr %s27, 128
          %s1401 = scalar_lea.hbm %s6, %s1400
          %s1403 = sshll.u32 %s1393, 4
          %s1404 = int_to_ptr.vmem [resolvable:$true] %s1403
          %1406 = dma.vmem_to_hbm [thread:$0]  %s1404, 128, %s1401, %s1390
        $region68: #{tpu_custom_call.1} parent=43 // pred_fallthru
          _
      $region44: #{tpu_custom_call.1} parent=5 // pred_fallthru
        _
      %p1407 = scmp.le.s32.totalorder 2, %s22
      // Predicated region
      $region69: #{tpu_custom_call.1} parent=5 // pred_check
        %p1408 = pneg %p1407
      $region70: #{tpu_custom_call.1} parent=5 // pred_check_branch
        %1410 = sbr.rel (%p1408) target = $region72
      $region71: #{tpu_custom_call.1} parent=5 // pred_region
        %s1411 = ssub.s32 %s22, 2
        // Predicated region
        $region73: #{tpu_custom_call.1} parent=71 // pred_check
          %p1412 = pneg %p187
        $region74: #{tpu_custom_call.1} parent=71 // pred_check_branch
          %1414 = sbr.rel (%p1412) target = $region76
        $region75: #{tpu_custom_call.1} parent=71 // pred_region
          %s1415 = sand.u32 %s172, 1
          %s1416 = scalar_lea.sflag [#allocation5], %s1415
          %s1417 = sand.u32 %s172, 1
          %s1418 = smul.addr %s1417, 8
          %s1419 = scalar_lea.vmem [#allocation12], %s1418
          %1420 = dma.done %s1416, 128
        $region76: #{tpu_custom_call.1} parent=71 // pred_fallthru
          _
      $region72: #{tpu_custom_call.1} parent=5 // pred_fallthru
        _
    $region6: #{tpu_custom_call.1} parent=1 // loop_footer
      %s26 = sadd.s32 1, %s22
    $region7: #{tpu_custom_call.1} parent=1 // loop_footer_branch
      %21 = sbr.rel target = $region3
    $region8: #{tpu_custom_call.1} parent=1 // loop_exit
      _
    %1421 = vsyncpa [#allocation4], 1
    %s1422 = scalar_lea.sflag [#allocation4], 1
    %1423 = vsyncpa %s1422, 1
    %1424 = vsyncpa [#allocation7], 1
    %s1425 = scalar_lea.sflag [#allocation7], 1
    %1426 = vsyncpa %s1425, 1
    %1427 = vsyncpa [#allocation10], 1
    %1428 = vsyncpa [#allocation5], 1
    %s1429 = scalar_lea.sflag [#allocation5], 1
    %1430 = vsyncpa %s1429, 1

</llo_original>
